<compile_context>
chip_gen: v7x
topology: tpu7x:2x2x1
jax: 0.10.0
libtpu: 0.0.40
codegen_flags: <defaults>
</compile_context>

<pallas_src>
import functools

import jax
import jax.numpy as jnp
from jax.experimental import pallas as pl
from jax.experimental.pallas import tpu as pltpu

EPS = 1e-5


# --------------------------- pass 1: row statistics --------------------------
def _row_stats_kernel(x_ref, mean_ref, rstd_ref, mean_acc, m2_acc,
                      *, tile_k, inv_n):
    k = pl.program_id(1)

    @pl.when(k == 0)
    def _():
        mean_acc[...] = jnp.zeros_like(mean_acc)
        m2_acc[...] = jnp.zeros_like(m2_acc)

    x = x_ref[...].astype(jnp.float32)                         # (TB, TK)
    t_mean = jnp.mean(x, axis=-1, keepdims=True)               # per-tile mean
    d = x - t_mean
    t_m2 = jnp.sum(d * d, axis=-1, keepdims=True)              # per-tile M2

    # Chan parallel-variance combine (n_a = 0 at k == 0 degenerates correctly).
    n_a = (k * tile_k).astype(jnp.float32)
    n_b = jnp.float32(tile_k)
    tot = n_a + n_b
    delta = t_mean - mean_acc[...]
    mean_acc[...] = mean_acc[...] + delta * (n_b / tot)
    m2_acc[...] = m2_acc[...] + t_m2 + (delta * delta) * (n_a * n_b / tot)

    @pl.when(k == pl.num_programs(1) - 1)
    def _():
        mean_ref[...] = mean_acc[...]
        var = m2_acc[...] * inv_n                              # biased (PyTorch LN)
        rstd_ref[...] = jax.lax.rsqrt(var + EPS)


# --------------- pass 2: K-streamed LN -> sigmoid -> partial @W1 -------------
def _stream_matmul_kernel(x_ref, mean_ref, rstd_ref, g1_ref, b1_ref, w1_ref,
                          o_ref):
    k = pl.program_id(2)

    @pl.when(k == 0)
    def _():
        o_ref[...] = jnp.zeros_like(o_ref)

    x = x_ref[...].astype(jnp.float32)                         # (TB, TK), f32 VPU
    xn = (x - mean_ref[...]) * rstd_ref[...]                   # (TB,1) broadcasts
    xn = xn * g1_ref[...] + b1_ref[...]                        # (1,TK) broadcasts
    s = jax.nn.sigmoid(xn)                                     # f32 (EUP)
    # Accumulate straight into the resident f32 output block (no acc scratch).
    o_ref[...] += jnp.dot(s.astype(jnp.bfloat16), w1_ref[...],
                          preferred_element_type=jnp.float32)


# ------------- pass 3: +bias1, *42, LN(256), ReLU, dropout, @W2 --------------
def _finalize_kernel(h_ref, bias1_ref, g2_ref, b2_ref, w2_ref, bias2_ref,
                     o_ref):
    h = h_ref[...] + bias1_ref[...]
    h = 42.0 * h                   # (the torch print/graph-break is a numeric no-op)
    mu = jnp.mean(h, axis=-1, keepdims=True)
    hc = h - mu
    var = jnp.mean(hc * hc, axis=-1, keepdims=True)
    h = hc * jax.lax.rsqrt(var + EPS)
    h = h * g2_ref[...] + b2_ref[...]
    h = jnp.maximum(h, 0.0)
    # TODO(synk): Dropout(0.1) is inference-mode identity; training parity needs
    # pltpu.prng_seed/prng_random_bits mask + 1/(1-p) scaling.
    out = jnp.dot(h.astype(jnp.bfloat16), w2_ref[...],
                  preferred_element_type=jnp.float32)
    o_ref[...] = (out + bias2_ref[...]).astype(o_ref.dtype)


def _vmem_limit(buffer_bytes, headroom=4 << 20, floor=16 << 20, cap=48 << 20):
    """Explicit scoped-VMEM budget: footprint + headroom, clamped to [floor, cap]."""
    return int(min(max(int(buffer_bytes) + headroom, floor), cap))


@functools.partial(jax.jit, static_argnames=("tile_b", "stats_tile_k",
                                             "mm_tile_k", "h_splits"))
def fused_model(x, g1, b1, w1, bias1, g2, b2, w2, bias2, *,
                tile_b, stats_tile_k, mm_tile_k, h_splits=1):
    B, D_IN = x.shape
    H = w1.shape[1]
    assert B % tile_b == 0
    assert D_IN % stats_tile_k == 0 and D_IN % mm_tile_k == 0
    assert H % h_splits == 0 and (H // h_splits) % 128 == 0
    n_b = B // tile_b
    n_k1 = D_IN // stats_tile_k
    n_k2 = D_IN // mm_tile_k
    th = H // h_splits

    # ------------------------------ pass 1: stats ----------------------------
    stats_vmem = 2 * (tile_b * stats_tile_k * 4) + 4 * (tile_b * 4) + (1 << 20)
    mean, rstd = pl.pallas_call(
        functools.partial(_row_stats_kernel, tile_k=stats_tile_k, inv_n=1.0 / D_IN),
        out_shape=(jax.ShapeDtypeStruct((B, 1), jnp.float32),
                   jax.ShapeDtypeStruct((B, 1), jnp.float32)),
        grid_spec=pltpu.PrefetchScalarGridSpec(
            num_scalar_prefetch=0,
            grid=(n_b, n_k1),
            in_specs=[pl.BlockSpec((tile_b, stats_tile_k), lambda i, k: (i, k))],
            out_specs=(pl.BlockSpec((tile_b, 1), lambda i, k: (i, 0)),
                       pl.BlockSpec((tile_b, 1), lambda i, k: (i, 0))),
            scratch_shapes=[pltpu.VMEM((tile_b, 1), jnp.float32),
                            pltpu.VMEM((tile_b, 1), jnp.float32)]),
        compiler_params=pltpu.CompilerParams(
            dimension_semantics=("parallel", "arbitrary"),
            vmem_limit_bytes=_vmem_limit(stats_vmem)),
        cost_estimate=pl.CostEstimate(
            flops=4 * B * D_IN, transcendentals=0,
            bytes_accessed=B * D_IN * x.dtype.itemsize),
    )(x)

    # ------------------------ pass 2: streamed x @ W1 ------------------------
    mm_vmem = (2 * (tile_b * mm_tile_k * 4            # x slab
                    + 2 * mm_tile_k * 4               # gamma1/beta1 slabs
                    + mm_tile_k * th * w1.dtype.itemsize)   # W1 slab
               + 2 * tile_b * th * 4                  # resident out block
               + 4 * tile_b * 4)                      # mean / rstd
    h_partial = pl.pallas_call(
        _stream_matmul_kernel,
        out_shape=jax.ShapeDtypeStruct((B, H), jnp.float32),
        grid_spec=pltpu.PrefetchScalarGridSpec(
            num_scalar_prefetch=0,
            grid=(n_b, h_splits, n_k2),
            in_specs=[
                pl.BlockSpec((tile_b, mm_tile_k), lambda i, j, k: (i, k)),  # x
                pl.BlockSpec((tile_b, 1), lambda i, j, k: (i, 0)),          # mean
                pl.BlockSpec((tile_b, 1), lambda i, j, k: (i, 0)),          # rstd
                pl.BlockSpec((1, mm_tile_k), lambda i, j, k: (0, k)),       # gamma1
                pl.BlockSpec((1, mm_tile_k), lambda i, j, k: (0, k)),       # beta1
                pl.BlockSpec((mm_tile_k, th), lambda i, j, k: (k, j)),      # W1
            ],
            out_specs=pl.BlockSpec((tile_b, th), lambda i, j, k: (i, j)),   # lane-dense
        ),
        compiler_params=pltpu.CompilerParams(
            dimension_semantics=("parallel", "parallel", "arbitrary"),
            vmem_limit_bytes=_vmem_limit(mm_vmem)),
        cost_estimate=pl.CostEstimate(
            flops=2 * B * D_IN * H + 5 * B * D_IN,
            transcendentals=B * D_IN * h_splits,
            bytes_accessed=(h_splits * B * D_IN * x.dtype.itemsize
                            + n_b * D_IN * H * w1.dtype.itemsize
                            + B * H * 4)),
    )(x, mean, rstd, g1, b1, w1)

    # ------------------------- pass 3: tiny finalize -------------------------
    const = lambda i: (0, 0)
    fin_vmem = 2 * (tile_b * H * 4 + H * H * w2.dtype.itemsize + 4 * H * 4
                    + tile_b * H * 4)
    return pl.pallas_call(
        _finalize_kernel,
        out_shape=jax.ShapeDtypeStruct((B, H), jnp.float32),
        grid_spec=pltpu.PrefetchScalarGridSpec(
            num_scalar_prefetch=0,
            grid=(n_b,),
            in_specs=[
                pl.BlockSpec((tile_b, H), lambda i: (i, 0)),   # h partial
                pl.BlockSpec((1, H), const),                   # bias1
                pl.BlockSpec((1, H), const),                   # gamma2
                pl.BlockSpec((1, H), const),                   # beta2
                pl.BlockSpec((H, H), const),                   # W2 (bf16)
                pl.BlockSpec((1, H), const),                   # bias2
            ],
            out_specs=pl.BlockSpec((tile_b, H), lambda i: (i, 0)),
        ),
        compiler_params=pltpu.CompilerParams(
            dimension_semantics=("parallel",),
            vmem_limit_bytes=_vmem_limit(fin_vmem)),
        cost_estimate=pl.CostEstimate(
            flops=2 * B * H * H, transcendentals=0,
            bytes_accessed=B * H * 8 + H * H * w2.dtype.itemsize),
    )(h_partial, bias1, g2, b2, w2, bias2)


def _reference(x, g1, b1, w1, bias1, g2, b2, w2, bias2):
    def ln(v, g, b):
        mu = jnp.mean(v, axis=-1, keepdims=True)
        var = jnp.mean((v - mu) ** 2, axis=-1, keepdims=True)
        return (v - mu) * jax.lax.rsqrt(var + EPS) * g + b

    h = jax.nn.sigmoid(ln(x, g1, b1))
    # Match the kernel: bf16 MXU operands, f32 accumulation.
    h = jnp.dot(h.astype(jnp.bfloat16), w1,
                preferred_element_type=jnp.float32) + bias1
    h = 42.0 * h
    h = jnp.maximum(ln(h, g2, b2), 0.0)
    return jnp.dot(h.astype(jnp.bfloat16), w2,
                   preferred_element_type=jnp.float32) + bias2


if __name__ == "__main__":
    # Demo sizes: the module's D_IN = 2**20 is shrunk to 2**11 so the script
    # stays small; the kernels are K-tiled and shape-agnostic.  At full width
    # use stats_tile_k ~ 32-64K, mm_tile_k ~ 16K (v7x) / 32K (v5e/v6e),
    # tile_b 128-256 so n_b stays 1, and h_splits=2 on v7x (1 on 1-TC chips).
    B, D_IN, H = 16, 2048, 256
    TILE_B = 16            # whole batch in one M tile (n_b = 1 -> W1 streamed once)
    STATS_TILE_K = 1024    # pass-1 tile, decoupled and larger than pass-2's
    MM_TILE_K = 512        # pass-2 K slab
    H_SPLITS = 2           # exercises the v7x dual-TC column split (2 x 128 lanes)

    key = jax.random.PRNGKey(0)
    ks = jax.random.split(key, 9)

    x = jax.random.normal(ks[0], (B, D_IN), dtype=jnp.float32)

    # Deterministic synthetic parameters (not a checkpoint).
    g1 = 1.0 + 0.1 * jax.random.normal(ks[1], (1, D_IN), jnp.float32)
    b1 = 0.1 * jax.random.normal(ks[2], (1, D_IN), jnp.float32)
    w1 = (jax.random.normal(ks[3], (D_IN, H), jnp.float32)
          * (1.0 / jnp.sqrt(D_IN))).astype(jnp.bfloat16)      # (in, out), bf16
    bias1 = 0.01 * jax.random.normal(ks[4], (1, H), jnp.float32)
    g2 = 1.0 + 0.1 * jax.random.normal(ks[5], (1, H), jnp.float32)
    b2 = 0.1 * jax.random.normal(ks[6], (1, H), jnp.float32)
    w2 = (jax.random.normal(ks[7], (H, H), jnp.float32)
          * (1.0 / jnp.sqrt(H))).astype(jnp.bfloat16)         # (in, out), bf16
    bias2 = 0.01 * jax.random.normal(ks[8], (1, H), jnp.float32)

    out = fused_model(x, g1, b1, w1, bias1, g2, b2, w2, bias2,
                      tile_b=TILE_B, stats_tile_k=STATS_TILE_K,
                      mm_tile_k=MM_TILE_K, h_splits=H_SPLITS)
    out = jax.block_until_ready(out)

    ref = _reference(x, g1, b1, w1, bias1, g2, b2, w2, bias2)
    assert out.shape == (B, H)
    assert jnp.allclose(out, ref, atol=1e-2, rtol=1e-2), "mismatch vs reference"

    print("KERNEL_OK")
</pallas_src>

<mosaic_0001>
module attributes {stable_mosaic.version = 11 : i64} {
  func.func @_row_stats_kernel(%arg0: i32, %arg1: i32, %arg2: memref<16x1024xf32, #tpu.memory_space<vmem>>, %arg3: memref<16x1xf32, #tpu.memory_space<vmem>>, %arg4: memref<16x1xf32, #tpu.memory_space<vmem>>, %arg5: memref<16x1xf32, #tpu.memory_space<vmem>>, %arg6: memref<16x1xf32, #tpu.memory_space<vmem>>) attributes {dimension_semantics = [#tpu.dimension_semantics<parallel>, #tpu.dimension_semantics<arbitrary>], iteration_bounds = array<i64: 1, 2>, scalar_prefetch = 0 : i64, scratch_operands = 2 : i64, tpu.core_type = #tpu.core_type<tc>, window_params = [{transform_indices = @transform_0, window_bounds = array<i64: 16, 1024>}, {transform_indices = @transform_1, window_bounds = array<i64: 16, 1>}, {transform_indices = @transform_2, window_bounds = array<i64: 16, 1>}]} {
    %c0_i32 = arith.constant 0 : i32
    %0 = arith.cmpi eq, %arg1, %c0_i32 : i32
    %1 = arith.extui %0 : i1 to i32
    %c0_i32_0 = arith.constant 0 : i32
    %2 = arith.cmpi ne, %1, %c0_i32_0 : i32
    scf.if %2 {
      %cst_18 = arith.constant 0.000000e+00 : f32
      %36 = vector.broadcast %cst_18 : f32 to vector<16x1xf32>
      %c0_19 = arith.constant 0 : index
      %c0_20 = arith.constant 0 : index
      %37 = vector.load %arg5[%c0_19, %c0_20] : memref<16x1xf32, #tpu.memory_space<vmem>>, vector<16x1xf32>
      tpu.vector_store %arg5[%c0_19, %c0_20], %36 {strides = array<i32>} : memref<16x1xf32, #tpu.memory_space<vmem>>, vector<16x1xf32>,
      %cst_21 = arith.constant 0.000000e+00 : f32
      %38 = vector.broadcast %cst_21 : f32 to vector<16x1xf32>
      %c0_22 = arith.constant 0 : index
      %c0_23 = arith.constant 0 : index
      %39 = vector.load %arg6[%c0_22, %c0_23] : memref<16x1xf32, #tpu.memory_space<vmem>>, vector<16x1xf32>
      tpu.vector_store %arg6[%c0_22, %c0_23], %38 {strides = array<i32>} : memref<16x1xf32, #tpu.memory_space<vmem>>, vector<16x1xf32>,
    } else {
    }
    %c0 = arith.constant 0 : index
    %c0_1 = arith.constant 0 : index
    %3 = vector.load %arg2[%c0, %c0_1] : memref<16x1024xf32, #tpu.memory_space<vmem>>, vector<16x1024xf32>
    %cst = arith.constant dense<0.000000e+00> : vector<16xf32>
    %4 = vector.multi_reduction <add>, %3, %cst [1] : vector<16x1024xf32> to vector<16xf32>
    %5 = vector.shape_cast %4 : vector<16xf32> to vector<16x1xf32>
    %cst_2 = arith.constant 1.024000e+03 : f32
    %6 = vector.broadcast %cst_2 : f32 to vector<16x1xf32>
    %7 = arith.divf %5, %6 : vector<16x1xf32>
    %8 = vector.broadcast %7 : vector<16x1xf32> to vector<16x1024xf32>
    %9 = arith.subf %3, %8 : vector<16x1024xf32>
    %10 = arith.mulf %9, %9 : vector<16x1024xf32>
    %cst_3 = arith.constant dense<0.000000e+00> : vector<16xf32>
    %11 = vector.multi_reduction <add>, %10, %cst_3 [1] : vector<16x1024xf32> to vector<16xf32>
    %12 = vector.shape_cast %11 : vector<16xf32> to vector<16x1xf32>
    %c1024_i32 = arith.constant 1024 : i32
    %13 = arith.muli %arg1, %c1024_i32 : i32
    %14 = arith.sitofp %13 : i32 to f32
    %cst_4 = arith.constant 1.024000e+03 : f32
    %15 = arith.addf %14, %cst_4 : f32
    %c0_5 = arith.constant 0 : index
    %c0_6 = arith.constant 0 : index
    %16 = vector.load %arg5[%c0_5, %c0_6] : memref<16x1xf32, #tpu.memory_space<vmem>>, vector<16x1xf32>
    %17 = arith.subf %7, %16 : vector<16x1xf32>
    %c0_7 = arith.constant 0 : index
    %c0_8 = arith.constant 0 : index
    %18 = vector.load %arg5[%c0_7, %c0_8] : memref<16x1xf32, #tpu.memory_space<vmem>>, vector<16x1xf32>
    %cst_9 = arith.constant 1.024000e+03 : f32
    %19 = arith.divf %cst_9, %15 : f32
    %20 = vector.broadcast %19 : f32 to vector<16x1xf32>
    %21 = arith.mulf %17, %20 : vector<16x1xf32>
    %22 = arith.addf %18, %21 : vector<16x1xf32>
    %c0_10 = arith.constant 0 : index
    %c0_11 = arith.constant 0 : index
    %23 = vector.load %arg5[%c0_10, %c0_11] : memref<16x1xf32, #tpu.memory_space<vmem>>, vector<16x1xf32>
    tpu.vector_store %arg5[%c0_10, %c0_11], %22 {strides = array<i32>} : memref<16x1xf32, #tpu.memory_space<vmem>>, vector<16x1xf32>,
    %c0_12 = arith.constant 0 : index
    %c0_13 = arith.constant 0 : index
    %24 = vector.load %arg6[%c0_12, %c0_13] : memref<16x1xf32, #tpu.memory_space<vmem>>, vector<16x1xf32>
    %25 = arith.addf %24, %12 : vector<16x1xf32>
    %26 = arith.mulf %17, %17 : vector<16x1xf32>
    %cst_14 = arith.constant 1.024000e+03 : f32
    %27 = arith.mulf %14, %cst_14 : f32
    %28 = arith.divf %27, %15 : f32
    %29 = vector.broadcast %28 : f32 to vector<16x1xf32>
    %30 = arith.mulf %26, %29 : vector<16x1xf32>
    %31 = arith.addf %25, %30 : vector<16x1xf32>
    %c0_15 = arith.constant 0 : index
    %c0_16 = arith.constant 0 : index
    %32 = vector.load %arg6[%c0_15, %c0_16] : memref<16x1xf32, #tpu.memory_space<vmem>>, vector<16x1xf32>
    tpu.vector_store %arg6[%c0_15, %c0_16], %31 {strides = array<i32>} : memref<16x1xf32, #tpu.memory_space<vmem>>, vector<16x1xf32>,
    %c1_i32 = arith.constant 1 : i32
    %33 = arith.cmpi eq, %arg1, %c1_i32 : i32
    %34 = arith.extui %33 : i1 to i32
    %c0_i32_17 = arith.constant 0 : i32
    %35 = arith.cmpi ne, %34, %c0_i32_17 : i32
    scf.if %35 {
      %c0_18 = arith.constant 0 : index
      %c0_19 = arith.constant 0 : index
      %36 = vector.load %arg5[%c0_18, %c0_19] : memref<16x1xf32, #tpu.memory_space<vmem>>, vector<16x1xf32>
      %c0_20 = arith.constant 0 : index
      %c0_21 = arith.constant 0 : index
      %37 = vector.load %arg3[%c0_20, %c0_21] : memref<16x1xf32, #tpu.memory_space<vmem>>, vector<16x1xf32>
      tpu.vector_store %arg3[%c0_20, %c0_21], %36 {strides = array<i32>} : memref<16x1xf32, #tpu.memory_space<vmem>>, vector<16x1xf32>,
      %c0_22 = arith.constant 0 : index
      %c0_23 = arith.constant 0 : index
      %38 = vector.load %arg6[%c0_22, %c0_23] : memref<16x1xf32, #tpu.memory_space<vmem>>, vector<16x1xf32>
      %cst_24 = arith.constant 4.8828125E-4 : f32
      %39 = vector.broadcast %cst_24 : f32 to vector<16x1xf32>
      %40 = arith.mulf %38, %39 : vector<16x1xf32>
      %cst_25 = arith.constant 9.99999974E-6 : f32
      %41 = vector.broadcast %cst_25 : f32 to vector<16x1xf32>
      %42 = arith.addf %40, %41 : vector<16x1xf32>
      %43 = math.rsqrt %42 : vector<16x1xf32>
      %c0_26 = arith.constant 0 : index
      %c0_27 = arith.constant 0 : index
      %44 = vector.load %arg4[%c0_26, %c0_27] : memref<16x1xf32, #tpu.memory_space<vmem>>, vector<16x1xf32>
      tpu.vector_store %arg4[%c0_26, %c0_27], %43 {strides = array<i32>} : memref<16x1xf32, #tpu.memory_space<vmem>>, vector<16x1xf32>,
    } else {
    }
    return
  }
  func.func @transform_0(%arg0: i32, %arg1: i32) -> (i32, i32) {
    %c0_i32 = arith.constant 0 : i32
    return %arg0, %arg1 : i32, i32
  }
  func.func @transform_1(%arg0: i32, %arg1: i32) -> (i32, i32) {
    %c0_i32 = arith.constant 0 : i32
    %c0_i32_0 = arith.constant 0 : i32
    return %arg0, %c0_i32 : i32, i32
  }
  func.func @transform_2(%arg0: i32, %arg1: i32) -> (i32, i32) {
    %c0_i32 = arith.constant 0 : i32
    %c0_i32_0 = arith.constant 0 : i32
    return %arg0, %c0_i32 : i32, i32
  }
}

module attributes {stable_mosaic.version = 11 : i64} {
  func.func @_stream_matmul_kernel(%arg0: i32, %arg1: i32, %arg2: i32, %arg3: memref<16x512xf32, #tpu.memory_space<vmem>>, %arg4: memref<16x1xf32, #tpu.memory_space<vmem>>, %arg5: memref<16x1xf32, #tpu.memory_space<vmem>>, %arg6: memref<1x512xf32, #tpu.memory_space<vmem>>, %arg7: memref<1x512xf32, #tpu.memory_space<vmem>>, %arg8: memref<512x128xbf16, #tpu.memory_space<vmem>>, %arg9: memref<16x128xf32, #tpu.memory_space<vmem>>) attributes {dimension_semantics = [#tpu.dimension_semantics<parallel>, #tpu.dimension_semantics<parallel>, #tpu.dimension_semantics<arbitrary>], iteration_bounds = array<i64: 1, 2, 4>, scalar_prefetch = 0 : i64, scratch_operands = 0 : i64, tpu.core_type = #tpu.core_type<tc>, window_params = [{transform_indices = @transform_0, window_bounds = array<i64: 16, 512>}, {transform_indices = @transform_1, window_bounds = array<i64: 16, 1>}, {transform_indices = @transform_2, window_bounds = array<i64: 16, 1>}, {transform_indices = @transform_3, window_bounds = array<i64: 1, 512>}, {transform_indices = @transform_4, window_bounds = array<i64: 1, 512>}, {transform_indices = @transform_5, window_bounds = array<i64: 512, 128>}, {transform_indices = @transform_6, window_bounds = array<i64: 16, 128>}]} {
    %c0_i32 = arith.constant 0 : i32
    %0 = arith.cmpi eq, %arg2, %c0_i32 : i32
    %1 = arith.extui %0 : i1 to i32
    %c0_i32_0 = arith.constant 0 : i32
    %2 = arith.cmpi ne, %1, %c0_i32_0 : i32
    scf.if %2 {
      %cst_17 = arith.constant 0.000000e+00 : f32
      %27 = vector.broadcast %cst_17 : f32 to vector<16x128xf32>
      %c0_18 = arith.constant 0 : index
      %c0_19 = arith.constant 0 : index
      %28 = vector.load %arg9[%c0_18, %c0_19] : memref<16x128xf32, #tpu.memory_space<vmem>>, vector<16x128xf32>
      tpu.vector_store %arg9[%c0_18, %c0_19], %27 {strides = array<i32>} : memref<16x128xf32, #tpu.memory_space<vmem>>, vector<16x128xf32>,
    } else {
    }
    %c0 = arith.constant 0 : index
    %c0_1 = arith.constant 0 : index
    %3 = vector.load %arg3[%c0, %c0_1] : memref<16x512xf32, #tpu.memory_space<vmem>>, vector<16x512xf32>
    %c0_2 = arith.constant 0 : index
    %c0_3 = arith.constant 0 : index
    %4 = vector.load %arg4[%c0_2, %c0_3] : memref<16x1xf32, #tpu.memory_space<vmem>>, vector<16x1xf32>
    %5 = vector.broadcast %4 : vector<16x1xf32> to vector<16x512xf32>
    %6 = arith.subf %3, %5 : vector<16x512xf32>
    %c0_4 = arith.constant 0 : index
    %c0_5 = arith.constant 0 : index
    %7 = vector.load %arg5[%c0_4, %c0_5] : memref<16x1xf32, #tpu.memory_space<vmem>>, vector<16x1xf32>
    %8 = vector.broadcast %7 : vector<16x1xf32> to vector<16x512xf32>
    %9 = arith.mulf %6, %8 : vector<16x512xf32>
    %c0_6 = arith.constant 0 : index
    %c0_7 = arith.constant 0 : index
    %10 = vector.load %arg6[%c0_6, %c0_7] : memref<1x512xf32, #tpu.memory_space<vmem>>, vector<1x512xf32>
    %11 = vector.broadcast %10 : vector<1x512xf32> to vector<16x512xf32>
    %12 = arith.mulf %9, %11 : vector<16x512xf32>
    %c0_8 = arith.constant 0 : index
    %c0_9 = arith.constant 0 : index
    %13 = vector.load %arg7[%c0_8, %c0_9] : memref<1x512xf32, #tpu.memory_space<vmem>>, vector<1x512xf32>
    %14 = vector.broadcast %13 : vector<1x512xf32> to vector<16x512xf32>
    %15 = arith.addf %12, %14 : vector<16x512xf32>
    %16 = arith.negf %15 : vector<16x512xf32>
    %17 = math.exp %16 : vector<16x512xf32>
    %cst = arith.constant 1.000000e+00 : f32
    %18 = vector.broadcast %cst : f32 to vector<16x512xf32>
    %19 = arith.addf %18, %17 : vector<16x512xf32>
    %20 = arith.divf %18, %19 : vector<16x512xf32>
    %c0_10 = arith.constant 0 : index
    %c0_11 = arith.constant 0 : index
    %21 = vector.load %arg9[%c0_10, %c0_11] : memref<16x128xf32, #tpu.memory_space<vmem>>, vector<16x128xf32>
    %22 = arith.truncf %20 : vector<16x512xf32> to vector<16x512xbf16>
    %c0_12 = arith.constant 0 : index
    %c0_13 = arith.constant 0 : index
    %23 = vector.load %arg8[%c0_12, %c0_13] : memref<512x128xbf16, #tpu.memory_space<vmem>>, vector<512x128xbf16>
    %cst_14 = arith.constant dense<0.000000e+00> : vector<16x128xf32>
    %24 = tpu.matmul %22, %23, %cst_14 {dimension_numbers = #tpu.dot_dimension_numbers<[1], [0], [0], [1], [0, 0, 1, 1], [], []>} : vector<16x512xbf16>, vector<512x128xbf16>, vector<16x128xf32> -> vector<16x128xf32>
    %25 = arith.addf %21, %24 : vector<16x128xf32>
    %c0_15 = arith.constant 0 : index
    %c0_16 = arith.constant 0 : index
    %26 = vector.load %arg9[%c0_15, %c0_16] : memref<16x128xf32, #tpu.memory_space<vmem>>, vector<16x128xf32>
    tpu.vector_store %arg9[%c0_15, %c0_16], %25 {strides = array<i32>} : memref<16x128xf32, #tpu.memory_space<vmem>>, vector<16x128xf32>,
    return
  }
  func.func @transform_0(%arg0: i32, %arg1: i32, %arg2: i32) -> (i32, i32) {
    %c0_i32 = arith.constant 0 : i32
    return %arg0, %arg2 : i32, i32
  }
  func.func @transform_1(%arg0: i32, %arg1: i32, %arg2: i32) -> (i32, i32) {
    %c0_i32 = arith.constant 0 : i32
    %c0_i32_0 = arith.constant 0 : i32
    return %arg0, %c0_i32 : i32, i32
  }
  func.func @transform_2(%arg0: i32, %arg1: i32, %arg2: i32) -> (i32, i32) {
    %c0_i32 = arith.constant 0 : i32
    %c0_i32_0 = arith.constant 0 : i32
    return %arg0, %c0_i32 : i32, i32
  }
  func.func @transform_3(%arg0: i32, %arg1: i32, %arg2: i32) -> (i32, i32) {
    %c0_i32 = arith.constant 0 : i32
    %c0_i32_0 = arith.constant 0 : i32
    return %c0_i32, %arg2 : i32, i32
  }
  func.func @transform_4(%arg0: i32, %arg1: i32, %arg2: i32) -> (i32, i32) {
    %c0_i32 = arith.constant 0 : i32
    %c0_i32_0 = arith.constant 0 : i32
    return %c0_i32, %arg2 : i32, i32
  }
  func.func @transform_5(%arg0: i32, %arg1: i32, %arg2: i32) -> (i32, i32) {
    %c0_i32 = arith.constant 0 : i32
    return %arg2, %arg1 : i32, i32
  }
  func.func @transform_6(%arg0: i32, %arg1: i32, %arg2: i32) -> (i32, i32) {
    %c0_i32 = arith.constant 0 : i32
    return %arg0, %arg1 : i32, i32
  }
}

module attributes {stable_mosaic.version = 11 : i64} {
  func.func @_finalize_kernel(%arg0: i32, %arg1: memref<16x256xf32, #tpu.memory_space<vmem>>, %arg2: memref<1x256xf32, #tpu.memory_space<vmem>>, %arg3: memref<1x256xf32, #tpu.memory_space<vmem>>, %arg4: memref<1x256xf32, #tpu.memory_space<vmem>>, %arg5: memref<256x256xbf16, #tpu.memory_space<vmem>>, %arg6: memref<1x256xf32, #tpu.memory_space<vmem>>, %arg7: memref<16x256xf32, #tpu.memory_space<vmem>>) attributes {dimension_semantics = [#tpu.dimension_semantics<parallel>], iteration_bounds = array<i64: 1>, scalar_prefetch = 0 : i64, scratch_operands = 0 : i64, tpu.core_type = #tpu.core_type<tc>, window_params = [{transform_indices = @transform_0, window_bounds = array<i64: 16, 256>}, {pipeline_mode = #tpu.pipeline_mode<synchronous>, transform_indices = @transform_1, window_bounds = array<i64: 1, 256>}, {pipeline_mode = #tpu.pipeline_mode<synchronous>, transform_indices = @transform_2, window_bounds = array<i64: 1, 256>}, {pipeline_mode = #tpu.pipeline_mode<synchronous>, transform_indices = @transform_3, window_bounds = array<i64: 1, 256>}, {pipeline_mode = #tpu.pipeline_mode<synchronous>, transform_indices = @transform_4, window_bounds = array<i64: 256, 256>}, {pipeline_mode = #tpu.pipeline_mode<synchronous>, transform_indices = @transform_5, window_bounds = array<i64: 1, 256>}, {transform_indices = @transform_6, window_bounds = array<i64: 16, 256>}]} {
    %c0 = arith.constant 0 : index
    %c0_0 = arith.constant 0 : index
    %0 = vector.load %arg1[%c0, %c0_0] : memref<16x256xf32, #tpu.memory_space<vmem>>, vector<16x256xf32>
    %c0_1 = arith.constant 0 : index
    %c0_2 = arith.constant 0 : index
    %1 = vector.load %arg2[%c0_1, %c0_2] : memref<1x256xf32, #tpu.memory_space<vmem>>, vector<1x256xf32>
    %2 = vector.broadcast %1 : vector<1x256xf32> to vector<16x256xf32>
    %3 = arith.addf %0, %2 : vector<16x256xf32>
    %cst = arith.constant 4.200000e+01 : f32
    %4 = vector.broadcast %cst : f32 to vector<16x256xf32>
    %5 = arith.mulf %4, %3 : vector<16x256xf32>
    %cst_3 = arith.constant dense<0.000000e+00> : vector<16xf32>
    %6 = vector.multi_reduction <add>, %5, %cst_3 [1] : vector<16x256xf32> to vector<16xf32>
    %7 = vector.shape_cast %6 : vector<16xf32> to vector<16x1xf32>
    %cst_4 = arith.constant 2.560000e+02 : f32
    %8 = vector.broadcast %cst_4 : f32 to vector<16x1xf32>
    %9 = arith.divf %7, %8 : vector<16x1xf32>
    %10 = vector.broadcast %9 : vector<16x1xf32> to vector<16x256xf32>
    %11 = arith.subf %5, %10 : vector<16x256xf32>
    %12 = arith.mulf %11, %11 : vector<16x256xf32>
    %cst_5 = arith.constant dense<0.000000e+00> : vector<16xf32>
    %13 = vector.multi_reduction <add>, %12, %cst_5 [1] : vector<16x256xf32> to vector<16xf32>
    %14 = vector.shape_cast %13 : vector<16xf32> to vector<16x1xf32>
    %cst_6 = arith.constant 2.560000e+02 : f32
    %15 = vector.broadcast %cst_6 : f32 to vector<16x1xf32>
    %16 = arith.divf %14, %15 : vector<16x1xf32>
    %cst_7 = arith.constant 9.99999974E-6 : f32
    %17 = vector.broadcast %cst_7 : f32 to vector<16x1xf32>
    %18 = arith.addf %16, %17 : vector<16x1xf32>
    %19 = math.rsqrt %18 : vector<16x1xf32>
    %20 = vector.broadcast %19 : vector<16x1xf32> to vector<16x256xf32>
    %21 = arith.mulf %11, %20 : vector<16x256xf32>
    %c0_8 = arith.constant 0 : index
    %c0_9 = arith.constant 0 : index
    %22 = vector.load %arg3[%c0_8, %c0_9] : memref<1x256xf32, #tpu.memory_space<vmem>>, vector<1x256xf32>
    %23 = vector.broadcast %22 : vector<1x256xf32> to vector<16x256xf32>
    %24 = arith.mulf %21, %23 : vector<16x256xf32>
    %c0_10 = arith.constant 0 : index
    %c0_11 = arith.constant 0 : index
    %25 = vector.load %arg4[%c0_10, %c0_11] : memref<1x256xf32, #tpu.memory_space<vmem>>, vector<1x256xf32>
    %26 = vector.broadcast %25 : vector<1x256xf32> to vector<16x256xf32>
    %27 = arith.addf %24, %26 : vector<16x256xf32>
    %cst_12 = arith.constant 0.000000e+00 : f32
    %28 = vector.broadcast %cst_12 : f32 to vector<16x256xf32>
    %29 = arith.maximumf %27, %28 : vector<16x256xf32>
    %30 = arith.truncf %29 : vector<16x256xf32> to vector<16x256xbf16>
    %c0_13 = arith.constant 0 : index
    %c0_14 = arith.constant 0 : index
    %31 = vector.load %arg5[%c0_13, %c0_14] : memref<256x256xbf16, #tpu.memory_space<vmem>>, vector<256x256xbf16>
    %cst_15 = arith.constant dense<0.000000e+00> : vector<16x256xf32>
    %32 = tpu.matmul %30, %31, %cst_15 {dimension_numbers = #tpu.dot_dimension_numbers<[1], [0], [0], [1], [0, 0, 1, 1], [], []>} : vector<16x256xbf16>, vector<256x256xbf16>, vector<16x256xf32> -> vector<16x256xf32>
    %c0_16 = arith.constant 0 : index
    %c0_17 = arith.constant 0 : index
    %33 = vector.load %arg6[%c0_16, %c0_17] : memref<1x256xf32, #tpu.memory_space<vmem>>, vector<1x256xf32>
    %34 = vector.broadcast %33 : vector<1x256xf32> to vector<16x256xf32>
    %35 = arith.addf %32, %34 : vector<16x256xf32>
    %c0_18 = arith.constant 0 : index
    %c0_19 = arith.constant 0 : index
    %36 = vector.load %arg7[%c0_18, %c0_19] : memref<16x256xf32, #tpu.memory_space<vmem>>, vector<16x256xf32>
    tpu.vector_store %arg7[%c0_18, %c0_19], %35 {strides = array<i32>} : memref<16x256xf32, #tpu.memory_space<vmem>>, vector<16x256xf32>,
    return
  }
  func.func @transform_0(%arg0: i32) -> (i32, i32) {
    %c0_i32 = arith.constant 0 : i32
    %c0_i32_0 = arith.constant 0 : i32
    return %arg0, %c0_i32 : i32, i32
  }
  func.func @transform_1(%arg0: i32) -> (i32, i32) {
    %c0_i32 = arith.constant 0 : i32
    %c0_i32_0 = arith.constant 0 : i32
    %c0_i32_1 = arith.constant 0 : i32
    return %c0_i32, %c0_i32_0 : i32, i32
  }
  func.func @transform_2(%arg0: i32) -> (i32, i32) {
    %c0_i32 = arith.constant 0 : i32
    %c0_i32_0 = arith.constant 0 : i32
    %c0_i32_1 = arith.constant 0 : i32
    return %c0_i32, %c0_i32_0 : i32, i32
  }
  func.func @transform_3(%arg0: i32) -> (i32, i32) {
    %c0_i32 = arith.constant 0 : i32
    %c0_i32_0 = arith.constant 0 : i32
    %c0_i32_1 = arith.constant 0 : i32
    return %c0_i32, %c0_i32_0 : i32, i32
  }
  func.func @transform_4(%arg0: i32) -> (i32, i32) {
    %c0_i32 = arith.constant 0 : i32
    %c0_i32_0 = arith.constant 0 : i32
    %c0_i32_1 = arith.constant 0 : i32
    return %c0_i32, %c0_i32_0 : i32, i32
  }
  func.func @transform_5(%arg0: i32) -> (i32, i32) {
    %c0_i32 = arith.constant 0 : i32
    %c0_i32_0 = arith.constant 0 : i32
    %c0_i32_1 = arith.constant 0 : i32
    return %c0_i32, %c0_i32_0 : i32, i32
  }
  func.func @transform_6(%arg0: i32) -> (i32, i32) {
    %c0_i32 = arith.constant 0 : i32
    %c0_i32_0 = arith.constant 0 : i32
    return %arg0, %c0_i32 : i32, i32
  }
}

</mosaic_0001>

<llo_original>
// kernel: fused_model.3
$region0: #{fused_model.3}
  #allocation0 [shape = 'u32[]', space=smem, size = 0x4, offset = 0x4, fixed_abs, tag = 'smem constant byte address 0x4 - core index']
  #allocation1 [shape = 'u32[144,128]{1,0:T(1,128)}', space=vmem, size = 0x12000, scoped, tag = 'internal scratch']
  #allocation2 [shape = 'f32[16,1]{1,0:T(8,128)}', space=vmem, size = 0x2000, scoped, tag = 'scratch operand']
  #allocation3 [shape = 'f32[16,1]{1,0:T(8,128)}', space=vmem, size = 0x2000, scoped, tag = 'scratch operand']
  %s0 = inlined_call_operand.hbm [shape: f32[16,2048], index: 0, kind: input, shape index: {}]
  %s1 = inlined_call_operand.vmem [shape: f32[16,1], index: 1, kind: output, shape index: {0}]
  %s2 = inlined_call_operand.vmem [shape: f32[16,1], index: 2, kind: output, shape index: {1}]
  %3 = xla_tuple %s1, %s2
  %s4 = sld [smem:[#allocation0]]
  $region57: #{fused_model.3} parent=0
    _
  %s6 = ssub.s32 1, %s4
  %s7 = scalar_select 0, %s6, %s4
  $region1: #{fused_model.3} parent=0
    #allocation4 [shape = 'u8[131072]{0}', space=vmem, size = 0x20000, scoped, tag = 'input window, operand 0']
    #allocation5 [shape = 's32[2]{0}', space=sflag, size = 0x8, scoped, tag = 'scoped memory for fused_model.3']
    %8 = vsyncpa [#allocation5], 0
    %s9 = scalar_lea.sflag [#allocation5], 1
    %10 = vsyncpa %s9, 0
    loop: start=0, step=1, limit=4
    $region2: #{fused_model.3} parent=1 // loop_pre_header
      _
    $region3: #{fused_model.3} parent=1 // loop_header
      %s12 = sphi 0, %s16
      %p13 = scmp.ge.s32.totalorder %s12, 4
      %s19 = sphi 0, %s31
      %s20 = sphi 0, %s27
      %s21 = sphi 0, %s19
      %s22 = sphi 0, %s20
      %s23 = sphi 0, %s21
      %s24 = sphi 0, %s22
      %s36 = sphi 0, %s38
      %s39 = sphi 0, %s36
      %s40 = sphi 0, %s39
      %s56 = sphi 0, %s40
      %s62 = sphi 0, %s64
      %s65 = sphi 0, %s62
      %s66 = sphi 0, %s65
      %s82 = sphi 0, %s66
      %s88 = sphi 0, %s90
      %s91 = sphi 0, %s88
      %s92 = sphi 0, %s91
      %s108 = sphi 0, %s92
    $region4: #{fused_model.3} parent=1 // loop_header_branch
      %15 = sbr.rel (%p13) target = $region8
    $region5: #{fused_model.3} parent=1 // loop_body
      %s17 = ssub.s32 %s12, 1
      %s18 = ssub.s32 %s12, 2
      %s25 = sadd.s32 1, %s20
      %p26 = scmp.ge.s32.totalorder %s25, 2
      %s27 = scalar_select %p26, 0, %s25
      %s28 = sadd.s32 1, %s19
      %s29 = scalar_select %p26, %s28, %s19
      %p30 = scmp.ge.s32.totalorder %s29, 1
      %s31 = scalar_select %p30, 0, %s29
      %s32 = ssub.s32 %s19, %s31
      %s33 = ssub.s32 %s20, %s27
      %s34 = sor.u32 %s32, %s33
      %p35 = scmp.eq.s32.totalorder %s34, 0
      %s37 = sadd.s32 %s36, 1
      %s38 = scalar_select %p35, %s36, %s37
      %p41 = pneg %p35
      %p42 = scmp.eq.s32.totalorder %s12, 1
      %p43 = por %p41, %p42
      %p44 = scmp.ne.s32.totalorder %s36, %s39
      %p45 = scmp.eq.s32.totalorder %s12, 0
      %p46 = por %p44, %p45
      %p47 = scmp.ne.s32.totalorder %s36, %s39
      %p48 = scmp.eq.s32.totalorder %s17, 1
      %p49 = por %p47, %p48
      %p50 = scmp.ne.s32.totalorder %s39, %s40
      %p51 = scmp.eq.s32.totalorder %s17, 0
      %p52 = por %p50, %p51
      %p53 = scmp.ne.s32.totalorder %s39, %s40
      %p54 = scmp.eq.s32.totalorder %s18, 1
      %p55 = por %p53, %p54
      %p57 = scmp.ne.s32.totalorder %s40, %s56
      %p58 = scmp.eq.s32.totalorder %s18, 0
      %p59 = por %p57, %p58
      %s60 = ssub.s32 %s19, %s31
      %p61 = scmp.eq.s32.totalorder %s60, 0
      %s63 = sadd.s32 %s62, 1
      %s64 = scalar_select %p61, %s62, %s63
      %p67 = pneg %p61
      %p68 = scmp.eq.s32.totalorder %s12, 1
      %p69 = por %p67, %p68
      %p70 = scmp.ne.s32.totalorder %s62, %s65
      %p71 = scmp.eq.s32.totalorder %s12, 0
      %p72 = por %p70, %p71
      %p73 = scmp.ne.s32.totalorder %s62, %s65
      %p74 = scmp.eq.s32.totalorder %s17, 1
      %p75 = por %p73, %p74
      %p76 = scmp.ne.s32.totalorder %s65, %s66
      %p77 = scmp.eq.s32.totalorder %s17, 0
      %p78 = por %p76, %p77
      %p79 = scmp.ne.s32.totalorder %s65, %s66
      %p80 = scmp.eq.s32.totalorder %s18, 1
      %p81 = por %p79, %p80
      %p83 = scmp.ne.s32.totalorder %s66, %s82
      %p84 = scmp.eq.s32.totalorder %s18, 0
      %p85 = por %p83, %p84
      %s86 = ssub.s32 %s19, %s31
      %p87 = scmp.eq.s32.totalorder %s86, 0
      %s89 = sadd.s32 %s88, 1
      %s90 = scalar_select %p87, %s88, %s89
      %p93 = pneg %p87
      %p94 = scmp.eq.s32.totalorder %s12, 1
      %p95 = por %p93, %p94
      %p96 = scmp.ne.s32.totalorder %s88, %s91
      %p97 = scmp.eq.s32.totalorder %s12, 0
      %p98 = por %p96, %p97
      %p99 = scmp.ne.s32.totalorder %s88, %s91
      %p100 = scmp.eq.s32.totalorder %s17, 1
      %p101 = por %p99, %p100
      %p102 = scmp.ne.s32.totalorder %s91, %s92
      %p103 = scmp.eq.s32.totalorder %s17, 0
      %p104 = por %p102, %p103
      %p105 = scmp.ne.s32.totalorder %s91, %s92
      %p106 = scmp.eq.s32.totalorder %s18, 1
      %p107 = por %p105, %p106
      %p109 = scmp.ne.s32.totalorder %s92, %s108
      %p110 = scmp.eq.s32.totalorder %s18, 0
      %p111 = por %p109, %p110
      %p112 = scmp.le.s32.totalorder 1, %s12
      %p113 = scmp.lt.s32.totalorder %s12, 3
      %p114 = pnand %p112, %p113
      %p115 = pneg %p114
      // Predicated region
      $region9: #{fused_model.3} parent=5 // pred_check
        _
      $region10: #{fused_model.3} parent=5 // pred_check_branch
        %117 = sbr.rel (%p114) target = $region12
      $region11: #{fused_model.3} parent=5 // pred_region
        %s118 = ssub.s32 %s12, 1
      $region12: #{fused_model.3} parent=5 // pred_fallthru
        _
      %p119 = scmp.lt.s32.totalorder %s12, 2
      // Predicated region
      $region13: #{fused_model.3} parent=5 // pred_check
        %p120 = pneg %p119
      $region14: #{fused_model.3} parent=5 // pred_check_branch
        %122 = sbr.rel (%p120) target = $region16
      $region15: #{fused_model.3} parent=5 // pred_region
        // Predicated region
        $region17: #{fused_model.3} parent=15 // pred_check
          %p123 = pneg %p46
        $region18: #{fused_model.3} parent=15 // pred_check_branch
          %125 = sbr.rel (%p123) target = $region20
        $region19: #{fused_model.3} parent=15 // pred_region
          %s126 = sand.u32 %s36, 1
          %s127 = scalar_lea.sflag [#allocation5], %s126
          %s128 = sand.u32 %s36, 1
          %s129 = smul.addr %s128, 128
          %s130 = scalar_lea.vmem [#allocation4], %s129
          %s131 = smul.u32 2, %s19
          %s132 = smul.u32 8, %s20
          %s134 = ssub.s32 2048, 2048
          %135 = vsyncadd %s127, %s134
          %s136 = smul.addr %s131, 16
          %s137 = sadd.s32 %s132, %s136
          %s138 = smul.addr %s137, 128
          %s139 = scalar_lea.hbm %s0, %s138
          %s140 = sshll.u32 %s130, 4
          %s141 = int_to_ptr.vmem [resolvable:$true] %s140
          %146 = dma.hbm_to_vmem [thread:$0]  %s139, 2048, %s141, %s127, 2048, 1024, 64
        $region20: #{fused_model.3} parent=15 // pred_fallthru
          _
      $region16: #{fused_model.3} parent=5 // pred_fallthru
        _
      %p147 = scmp.le.s32.totalorder 1, %s12
      %p148 = scmp.lt.s32.totalorder %s12, 3
      %p149 = pnand %p147, %p148
      %p150 = pneg %p149
      // Predicated region
      $region21: #{fused_model.3} parent=5 // pred_check
        _
      $region22: #{fused_model.3} parent=5 // pred_check_branch
        %152 = sbr.rel (%p149) target = $region24
      $region23: #{fused_model.3} parent=5 // pred_region
        %s153 = ssub.s32 %s12, 1
        %s154 = sand.u32 %s39, 1
        %s155 = scalar_lea.sflag [#allocation5], %s154
        %s156 = sand.u32 %s39, 1
        %s157 = smul.addr %s156, 128
        %s158 = scalar_lea.vmem [#allocation4], %s157
        // Predicated region
        $region25: #{fused_model.3} parent=23 // pred_check
          %p159 = pneg %p52
        $region26: #{fused_model.3} parent=23 // pred_check_branch
          %161 = sbr.rel (%p159) target = $region28
        $region27: #{fused_model.3} parent=23 // pred_region
          %162 = dma.done %s155, 2048
        $region28: #{fused_model.3} parent=23 // pred_fallthru
          _
        %s163 = sand.u32 %s39, 1
        %s164 = scalar_lea.sflag [#allocation5], %s163
        %s165 = sand.u32 %s39, 1
        %s166 = smul.addr %s165, 128
        %s167 = scalar_lea.vmem [#allocation4], %s166
        %p168 = pneg %p52
        %p169 = pneg %p49
        %p170 = pneg %p78
        %p171 = pneg %p75
        %s172 = smul.u32 2, %s21
        %p173 = scmp.lt.s32.totalorder %s172, 1
        %s174 = scalar_select %p173, %s172, 1
        %s175 = smul.addr %s174, 8
        %s176 = scalar_lea.vmem %s1, %s175
        %p177 = pneg %p104
        %p178 = pneg %p101
        %s179 = smul.u32 2, %s21
        %p180 = scmp.lt.s32.totalorder %s179, 1
        %s181 = scalar_select %p180, %s179, 1
        %s182 = smul.addr %s181, 8
        %s183 = scalar_lea.vmem %s2, %s182
        %s184 = smul.u32 2, %s21
        %s185 = smul.u32 8, %s22
        %s186 = smul.u32 2, %s21
        %p187 = scmp.lt.s32.totalorder %s186, 1
        %s188 = scalar_select %p187, %s186, 1
        %s189 = smul.addr %s188, 8
        %s190 = scalar_lea.vmem %s1, %s189
        %s191 = smul.u32 2, %s21
        %s192 = smul.u32 2, %s21
        %p193 = scmp.lt.s32.totalorder %s192, 1
        %s194 = scalar_select %p193, %s192, 1
        %s195 = smul.addr %s194, 8
        %s196 = scalar_lea.vmem %s2, %s195
        %s197 = smul.u32 2, %s21
        %p198 = scmp.eq.s32.totalorder %s22, 0
        // Predicated region
        $region29: #{fused_model.3} parent=23 // pred_check
          %p199 = pneg %p198
        $region30: #{fused_model.3} parent=23 // pred_check_branch
          %201 = sbr.rel (%p199) target = $region32
        $region31: #{fused_model.3} parent=23 // pred_region
          %vm202 = vcmask 7168
          %203 = vst.msk [vmem:[#allocation2] sm:$0xff] %vm202, 0.0
          %204 = vst.msk [vmem:[#allocation2 + $0x8] sm:$0xff] %vm202, 0.0
          %205 = vst.msk [vmem:[#allocation3] sm:$0xff] %vm202, 0.0
          %206 = vst.msk [vmem:[#allocation3 + $0x8] sm:$0xff] %vm202, 0.0
        $region32: #{fused_model.3} parent=23 // pred_fallthru
          _
        %v207 = vld [vmem:[%s158] sm:$0xff]
        %v208 = vld [vmem:[%s158 + $0x8] sm:$0xff]
        %v209 = vld [vmem:[%s158 + $0x10] sm:$0xff]
        %v210 = vld [vmem:[%s158 + $0x18] sm:$0xff]
        %v211 = vld [vmem:[%s158 + $0x20] sm:$0xff]
        %v212 = vld [vmem:[%s158 + $0x28] sm:$0xff]
        %v213 = vld [vmem:[%s158 + $0x30] sm:$0xff]
        %v214 = vld [vmem:[%s158 + $0x38] sm:$0xff]
        %v215 = vld [vmem:[%s158 + $0x40] sm:$0xff]
        %v216 = vld [vmem:[%s158 + $0x48] sm:$0xff]
        %v217 = vld [vmem:[%s158 + $0x50] sm:$0xff]
        %v218 = vld [vmem:[%s158 + $0x58] sm:$0xff]
        %v219 = vld [vmem:[%s158 + $0x60] sm:$0xff]
        %v220 = vld [vmem:[%s158 + $0x68] sm:$0xff]
        %v221 = vld [vmem:[%s158 + $0x70] sm:$0xff]
        %v222 = vld [vmem:[%s158 + $0x78] sm:$0xff]
        %v223 = vadd.f32 %v207, %v208
        %v224 = vadd.f32 %v223, %v209
        %v225 = vadd.f32 %v224, %v210
        %v226 = vadd.f32 %v225, %v211
        %v227 = vadd.f32 %v226, %v212
        %v228 = vadd.f32 %v227, %v213
        %v229 = vadd.f32 %v228, %v214
        %230 = vadd.xlane.f32.xlu0 %v229
        %v231 = vpop.xlane.xlu0 %230
        %v232 = vadd.f32 %v215, %v216
        %v233 = vadd.f32 %v232, %v217
        %v234 = vadd.f32 %v233, %v218
        %v235 = vadd.f32 %v234, %v219
        %v236 = vadd.f32 %v235, %v220
        %v237 = vadd.f32 %v236, %v221
        %v238 = vadd.f32 %v237, %v222
        %239 = vadd.xlane.f32.xlu0 %v238
        %v240 = vpop.xlane.xlu0 %239
        %v241 = vrcp.pop 1024.0
        %v242 = vmul.f32 %v231, %v241
        %v243 = vmul.f32 %v240, %v241
        %v244 = vsub.f32 %v207, %v242
        %v245 = vsub.f32 %v208, %v242
        %v246 = vsub.f32 %v209, %v242
        %v247 = vsub.f32 %v210, %v242
        %v248 = vsub.f32 %v211, %v242
        %v249 = vsub.f32 %v212, %v242
        %v250 = vsub.f32 %v213, %v242
        %v251 = vsub.f32 %v214, %v242
        %v252 = vsub.f32 %v215, %v243
        %v253 = vsub.f32 %v216, %v243
        %v254 = vsub.f32 %v217, %v243
        %v255 = vsub.f32 %v218, %v243
        %v256 = vsub.f32 %v219, %v243
        %v257 = vsub.f32 %v220, %v243
        %v258 = vsub.f32 %v221, %v243
        %v259 = vsub.f32 %v222, %v243
        %v260 = vmul.f32 %v244, %v244
        %v261 = vmul.f32 %v245, %v245
        %v262 = vmul.f32 %v246, %v246
        %v263 = vmul.f32 %v247, %v247
        %v264 = vmul.f32 %v248, %v248
        %v265 = vmul.f32 %v249, %v249
        %v266 = vmul.f32 %v250, %v250
        %v267 = vmul.f32 %v251, %v251
        %v268 = vmul.f32 %v252, %v252
        %v269 = vmul.f32 %v253, %v253
        %v270 = vmul.f32 %v254, %v254
        %v271 = vmul.f32 %v255, %v255
        %v272 = vmul.f32 %v256, %v256
        %v273 = vmul.f32 %v257, %v257
        %v274 = vmul.f32 %v258, %v258
        %v275 = vmul.f32 %v259, %v259
        %v276 = vadd.f32 %v260, %v261
        %v277 = vadd.f32 %v276, %v262
        %v278 = vadd.f32 %v277, %v263
        %v279 = vadd.f32 %v278, %v264
        %v280 = vadd.f32 %v279, %v265
        %v281 = vadd.f32 %v280, %v266
        %v282 = vadd.f32 %v281, %v267
        %283 = vadd.xlane.f32.xlu0 %v282
        %v284 = vpop.xlane.xlu0 %283
        %v285 = vadd.f32 %v268, %v269
        %v286 = vadd.f32 %v285, %v270
        %v287 = vadd.f32 %v286, %v271
        %v288 = vadd.f32 %v287, %v272
        %v289 = vadd.f32 %v288, %v273
        %v290 = vadd.f32 %v289, %v274
        %v291 = vadd.f32 %v290, %v275
        %292 = vadd.xlane.f32.xlu0 %v291
        %v293 = vpop.xlane.xlu0 %292
        %s294 = smul.u32 %s22, 1024
        %s295 = scvt.s32.f32 %s294
        %s296 = sadd.f32 %s295, 1024.0
        %v297 = vld [vmem:[#allocation2] sm:$0xff]
        %v298 = vld [vmem:[#allocation2 + $0x8] sm:$0xff]
        %v299 = vsub.f32 %v242, %v297
        %v300 = vsub.f32 %v243, %v298
        %v301 = vstv %s296
        %v302 = vrcp.pop %v301
        %s303 = vtos %v302
        %s304 = smul.f32 1024.0, %s303
        %v305 = vstv %s304
        %v306 = vmul.f32 %v299, %v305
        %v307 = vmul.f32 %v300, %v305
        %v308 = vadd.f32 %v297, %v306
        %v309 = vadd.f32 %v298, %v307
        %vm310 = vcmask 7168
        %311 = vst.msk [vmem:[#allocation2] sm:$0xff] %vm310, %v308
        %312 = vst.msk [vmem:[#allocation2 + $0x8] sm:$0xff] %vm310, %v309
        %v313 = vld [vmem:[#allocation3] sm:$0xff]
        %v314 = vld [vmem:[#allocation3 + $0x8] sm:$0xff]
        %v315 = vadd.f32 %v313, %v284
        %v316 = vadd.f32 %v314, %v293
        %v317 = vmul.f32 %v299, %v299
        %v318 = vmul.f32 %v300, %v300
        %s319 = smul.f32 %s295, 1024.0
        %v320 = vstv %s296
        %v321 = vrcp.pop %v320
        %s322 = vtos %v321
        %s323 = smul.f32 %s319, %s322
        %v324 = vstv %s323
        %v325 = vmul.f32 %v317, %v324
        %v326 = vmul.f32 %v318, %v324
        %v327 = vadd.f32 %v315, %v325
        %v328 = vadd.f32 %v316, %v326
        %329 = vst.msk [vmem:[#allocation3] sm:$0xff] %vm310, %v327
        %330 = vst.msk [vmem:[#allocation3 + $0x8] sm:$0xff] %vm310, %v328
        %p331 = scmp.eq.s32.totalorder %s22, 1
        // Predicated region
        $region33: #{fused_model.3} parent=23 // pred_check
          %p332 = pneg %p331
        $region34: #{fused_model.3} parent=23 // pred_check_branch
          %334 = sbr.rel (%p332) target = $region36
        $region35: #{fused_model.3} parent=23 // pred_region
          %v335 = vld [vmem:[#allocation2] sm:$0xff]
          %v336 = vld [vmem:[#allocation2 + $0x8] sm:$0xff]
          %337 = vst.msk [vmem:[%s190] sm:$0xff] %vm310, %v335
          %338 = vst.msk [vmem:[%s190 + $0x8] sm:$0xff] %vm310, %v336
          %v339 = vld [vmem:[#allocation3] sm:$0xff]
          %v340 = vld [vmem:[#allocation3 + $0x8] sm:$0xff]
          %v341 = vmul.f32 %v339, 0.00048828125
          %v342 = vmul.f32 %v340, 0.00048828125
          %v343 = vadd.f32 %v341, 1e-05
          %v344 = vadd.f32 %v342, 1e-05
          %v345 = vrsqrt.pop %v343
          %v346 = vrsqrt.pop %v344
          %347 = vst.msk [vmem:[%s196] sm:$0xff] %vm310, %v345
          %348 = vst.msk [vmem:[%s196 + $0x8] sm:$0xff] %vm310, %v346
        $region36: #{fused_model.3} parent=23 // pred_fallthru
          _
        %s349 = smul.u32 2, %s21
        %p350 = scmp.lt.s32.totalorder %s349, 1
        %s351 = scalar_select %p350, %s349, 1
        %s352 = smul.addr %s351, 8
        %s353 = scalar_lea.vmem %s1, %s352
        %s354 = smul.u32 2, %s21
        %p355 = scmp.lt.s32.totalorder %s354, 1
        %s356 = scalar_select %p355, %s354, 1
        %s357 = smul.addr %s356, 8
        %s358 = scalar_lea.vmem %s2, %s357
        // Predicated region
        $region37: #{fused_model.3} parent=23 // pred_check
          %p359 = pneg %p75
        $region38: #{fused_model.3} parent=23 // pred_check_branch
          %361 = sbr.rel (%p359) target = $region40
        $region39: #{fused_model.3} parent=23 // pred_region
          %s362 = smul.u32 2, %s21
        $region40: #{fused_model.3} parent=23 // pred_fallthru
          _
        // Predicated region
        $region41: #{fused_model.3} parent=23 // pred_check
          %p363 = pneg %p101
        $region42: #{fused_model.3} parent=23 // pred_check_branch
          %365 = sbr.rel (%p363) target = $region44
        $region43: #{fused_model.3} parent=23 // pred_region
          %s366 = smul.u32 2, %s21
        $region44: #{fused_model.3} parent=23 // pred_fallthru
          _
        // Predicated region
        $region45: #{fused_model.3} parent=23 // pred_check
          %p367 = pneg %p75
        $region46: #{fused_model.3} parent=23 // pred_check_branch
          %369 = sbr.rel (%p367) target = $region48
        $region47: #{fused_model.3} parent=23 // pred_region
          %s370 = smul.u32 2, %s21
          %p371 = scmp.lt.s32.totalorder %s370, 1
          %s372 = scalar_select %p371, %s370, 1
          %s373 = smul.addr %s372, 8
          %s374 = scalar_lea.vmem %s1, %s373
        $region48: #{fused_model.3} parent=23 // pred_fallthru
          _
        // Predicated region
        $region49: #{fused_model.3} parent=23 // pred_check
          %p375 = pneg %p101
        $region50: #{fused_model.3} parent=23 // pred_check_branch
          %377 = sbr.rel (%p375) target = $region52
        $region51: #{fused_model.3} parent=23 // pred_region
          %s378 = smul.u32 2, %s21
          %p379 = scmp.lt.s32.totalorder %s378, 1
          %s380 = scalar_select %p379, %s378, 1
          %s381 = smul.addr %s380, 8
          %s382 = scalar_lea.vmem %s2, %s381
        $region52: #{fused_model.3} parent=23 // pred_fallthru
          _
      $region24: #{fused_model.3} parent=5 // pred_fallthru
        _
      %p383 = scmp.le.s32.totalorder 2, %s12
      // Predicated region
      $region53: #{fused_model.3} parent=5 // pred_check
        %p384 = pneg %p383
      $region54: #{fused_model.3} parent=5 // pred_check_branch
        %386 = sbr.rel (%p384) target = $region56
      $region55: #{fused_model.3} parent=5 // pred_region
        %s387 = ssub.s32 %s12, 2
      $region56: #{fused_model.3} parent=5 // pred_fallthru
        _
    $region6: #{fused_model.3} parent=1 // loop_footer
      %s16 = sadd.s32 1, %s12
    $region7: #{fused_model.3} parent=1 // loop_footer_branch
      %11 = sbr.rel target = $region3
    $region8: #{fused_model.3} parent=1 // loop_exit
      _
    %388 = vsyncpa [#allocation5], 1
    %s389 = scalar_lea.sflag [#allocation5], 1
    %390 = vsyncpa %s389, 1

// kernel: fused_model.5
$region0: #{fused_model.5}
  #allocation0 [shape = 'u32[]', space=smem, size = 0x4, offset = 0x4, fixed_abs, tag = 'smem constant byte address 0x4 - core index']
  #allocation1 [shape = 'u32[144,128]{1,0:T(1,128)}', space=vmem, size = 0x12000, scoped, tag = 'internal scratch']
  %s0 = inlined_call_operand.vmem [shape: f32[16,256], index: 0, kind: input, shape index: {}]
  %s1 = inlined_call_operand.vmem [shape: f32[1,256], index: 1, kind: input, shape index: {}]
  %s2 = inlined_call_operand.vmem [shape: f32[1,256], index: 2, kind: input, shape index: {}]
  %s3 = inlined_call_operand.vmem [shape: f32[1,256], index: 3, kind: input, shape index: {}]
  %s4 = inlined_call_operand.vmem [shape: bf16[256,256], index: 4, kind: input, shape index: {}]
  %s5 = inlined_call_operand.vmem [shape: f32[1,256], index: 5, kind: input, shape index: {}]
  %s6 = inlined_call_operand.hbm [shape: f32[16,256], index: 6, kind: output, shape index: {}]
  %s7 = sld [smem:[#allocation0]]
  $region34: #{fused_model.5} parent=0
    _
  %s9 = ssub.s32 1, %s7
  %s10 = scalar_select 0, %s9, %s7
  $region1: #{fused_model.5} parent=0
    #allocation2 [shape = 'u8[16384]{0}', space=vmem, size = 0x4000, scoped, tag = 'output window, operand 0, single buffered']
    #allocation3 [shape = 's32[1]{0}', space=sflag, size = 0x4, scoped, tag = 'scoped memory for fused_model.5']
    %11 = vsyncpa [#allocation3], 0
    // Predicated region
    $region2: #{fused_model.5} parent=1 // pred_check
      _
    $region3: #{fused_model.5} parent=1 // pred_check_branch
      %13 = sbr.rel (0) target = $region5
    $region4: #{fused_model.5} parent=1 // pred_region
      _
    $region5: #{fused_model.5} parent=1 // pred_fallthru
      _
    // Predicated region
    $region6: #{fused_model.5} parent=1 // pred_check
      _
    $region7: #{fused_model.5} parent=1 // pred_check_branch
      %15 = sbr.rel (0) target = $region9
    $region8: #{fused_model.5} parent=1 // pred_region
      _
    $region9: #{fused_model.5} parent=1 // pred_fallthru
      _
    // Predicated region
    $region10: #{fused_model.5} parent=1 // pred_check
      _
    $region11: #{fused_model.5} parent=1 // pred_check_branch
      %17 = sbr.rel (0) target = $region13
    $region12: #{fused_model.5} parent=1 // pred_region
      _
    $region13: #{fused_model.5} parent=1 // pred_fallthru
      _
    // Predicated region
    $region14: #{fused_model.5} parent=1 // pred_check
      _
    $region15: #{fused_model.5} parent=1 // pred_check_branch
      %19 = sbr.rel (0) target = $region17
    $region16: #{fused_model.5} parent=1 // pred_region
      _
    $region17: #{fused_model.5} parent=1 // pred_fallthru
      _
    // Predicated region
    $region18: #{fused_model.5} parent=1 // pred_check
      _
    $region19: #{fused_model.5} parent=1 // pred_check_branch
      %21 = sbr.rel (0) target = $region21
    $region20: #{fused_model.5} parent=1 // pred_region
      _
    $region21: #{fused_model.5} parent=1 // pred_fallthru
      _
    // Predicated region
    $region22: #{fused_model.5} parent=1 // pred_check
      _
    $region23: #{fused_model.5} parent=1 // pred_check_branch
      %23 = sbr.rel (0) target = $region25
    $region24: #{fused_model.5} parent=1 // pred_region
      _
    $region25: #{fused_model.5} parent=1 // pred_fallthru
      _
    %v24 = vld [vmem:[%s0] sm:$0xff]
    %v25 = vld [vmem:[%s0 + $0x8] sm:$0xff]
    %v26 = vld [vmem:[%s0 + $0x10] sm:$0xff]
    %v27 = vld [vmem:[%s0 + $0x18] sm:$0xff]
    %v28 = vld [vmem:[%s1] sm:$0x3]
    %v30 = vlaneseq
    %v31 = vshrl.u32 %v30, 7
    %v32 = vsub.s32 0, %v31
    %v33 = vrot.slane %v28, %v32
    %v34 = vlaneseq
    %v35 = vshrl.u32 %v34, 7
    %v36 = vsub.s32 1, %v35
    %v37 = vrot.slane %v28, %v36
    %v40 = vadd.f32 %v24, %v33
    %v41 = vadd.f32 %v25, %v37
    %v42 = vadd.f32 %v26, %v33
    %v43 = vadd.f32 %v27, %v37
    %v44 = vmul.f32 %v40, 42.0
    %v45 = vmul.f32 %v41, 42.0
    %v46 = vmul.f32 %v42, 42.0
    %v47 = vmul.f32 %v43, 42.0
    %v48 = vadd.f32 %v44, %v45
    %49 = vadd.xlane.f32.xlu0 %v48
    %v50 = vpop.xlane.xlu0 %49
    %v51 = vadd.f32 %v46, %v47
    %52 = vadd.xlane.f32.xlu0 %v51
    %v53 = vpop.xlane.xlu0 %52
    %v54 = vrcp.pop 256.0
    %v55 = vmul.f32 %v50, %v54
    %v56 = vmul.f32 %v53, %v54
    %v57 = vsub.f32 %v44, %v55
    %v58 = vsub.f32 %v45, %v55
    %v59 = vsub.f32 %v46, %v56
    %v60 = vsub.f32 %v47, %v56
    %v61 = vmul.f32 %v57, %v57
    %v62 = vmul.f32 %v58, %v58
    %v63 = vmul.f32 %v59, %v59
    %v64 = vmul.f32 %v60, %v60
    %v65 = vadd.f32 %v61, %v62
    %66 = vadd.xlane.f32.xlu0 %v65
    %v67 = vpop.xlane.xlu0 %66
    %v68 = vadd.f32 %v63, %v64
    %69 = vadd.xlane.f32.xlu0 %v68
    %v70 = vpop.xlane.xlu0 %69
    %v71 = vmul.f32 %v67, %v54
    %v72 = vmul.f32 %v70, %v54
    %v73 = vadd.f32 %v71, 1e-05
    %v74 = vadd.f32 %v72, 1e-05
    %v75 = vrsqrt.pop %v73
    %v76 = vrsqrt.pop %v74
    %v77 = vmul.f32 %v57, %v75
    %v78 = vmul.f32 %v58, %v75
    %v79 = vmul.f32 %v59, %v76
    %v80 = vmul.f32 %v60, %v76
    %v81 = vld [vmem:[%s2] sm:$0x3]
    %v83 = vlaneseq
    %v84 = vshrl.u32 %v83, 7
    %v85 = vsub.s32 0, %v84
    %v86 = vrot.slane %v81, %v85
    %v87 = vlaneseq
    %v88 = vshrl.u32 %v87, 7
    %v89 = vsub.s32 1, %v88
    %v90 = vrot.slane %v81, %v89
    %v93 = vmul.f32 %v77, %v86
    %v94 = vmul.f32 %v78, %v90
    %v95 = vmul.f32 %v79, %v86
    %v96 = vmul.f32 %v80, %v90
    %v97 = vld [vmem:[%s3] sm:$0x3]
    %v99 = vlaneseq
    %v100 = vshrl.u32 %v99, 7
    %v101 = vsub.s32 0, %v100
    %v102 = vrot.slane %v97, %v101
    %v103 = vlaneseq
    %v104 = vshrl.u32 %v103, 7
    %v105 = vsub.s32 1, %v104
    %v106 = vrot.slane %v97, %v105
    %v109 = vadd.f32 %v93, %v102
    %v110 = vadd.f32 %v94, %v106
    %v111 = vadd.f32 %v95, %v102
    %v112 = vadd.f32 %v96, %v106
    %v113 = vmax.f32 %v109, 0.0
    %v114 = vmax.f32 %v110, 0.0
    %v115 = vmax.f32 %v111, 0.0
    %v116 = vmax.f32 %v112, 0.0
    %v117 = vpack.c.bf16 %v115, %v113
    %v118 = vpack.c.bf16 %v116, %v114
    %v119 = vld [vmem:[%s4] sm:$0xff]
    %v120 = vld [vmem:[%s4 + $0x8] sm:$0xff]
    %v121 = vld [vmem:[%s4 + $0x10] sm:$0xff]
    %v122 = vld [vmem:[%s4 + $0x18] sm:$0xff]
    %v123 = vld [vmem:[%s4 + $0x20] sm:$0xff]
    %v124 = vld [vmem:[%s4 + $0x28] sm:$0xff]
    %v125 = vld [vmem:[%s4 + $0x30] sm:$0xff]
    %v126 = vld [vmem:[%s4 + $0x38] sm:$0xff]
    %v127 = vld [vmem:[%s4 + $0x40] sm:$0xff]
    %v128 = vld [vmem:[%s4 + $0x48] sm:$0xff]
    %v129 = vld [vmem:[%s4 + $0x50] sm:$0xff]
    %v130 = vld [vmem:[%s4 + $0x58] sm:$0xff]
    %v131 = vld [vmem:[%s4 + $0x60] sm:$0xff]
    %v132 = vld [vmem:[%s4 + $0x68] sm:$0xff]
    %v133 = vld [vmem:[%s4 + $0x70] sm:$0xff]
    %v134 = vld [vmem:[%s4 + $0x78] sm:$0xff]
    %v135 = vld [vmem:[%s4 + $0x80] sm:$0xff]
    %v136 = vld [vmem:[%s4 + $0x88] sm:$0xff]
    %v137 = vld [vmem:[%s4 + $0x90] sm:$0xff]
    %v138 = vld [vmem:[%s4 + $0x98] sm:$0xff]
    %v139 = vld [vmem:[%s4 + $0xa0] sm:$0xff]
    %v140 = vld [vmem:[%s4 + $0xa8] sm:$0xff]
    %v141 = vld [vmem:[%s4 + $0xb0] sm:$0xff]
    %v142 = vld [vmem:[%s4 + $0xb8] sm:$0xff]
    %v143 = vld [vmem:[%s4 + $0xc0] sm:$0xff]
    %v144 = vld [vmem:[%s4 + $0xc8] sm:$0xff]
    %v145 = vld [vmem:[%s4 + $0xd0] sm:$0xff]
    %v146 = vld [vmem:[%s4 + $0xd8] sm:$0xff]
    %v147 = vld [vmem:[%s4 + $0xe0] sm:$0xff]
    %v148 = vld [vmem:[%s4 + $0xe8] sm:$0xff]
    %v149 = vld [vmem:[%s4 + $0xf0] sm:$0xff]
    %v150 = vld [vmem:[%s4 + $0xf8] sm:$0xff]
    %v151 = vld [vmem:[%s5] sm:$0x3]
    %v153 = vlaneseq
    %v154 = vshrl.u32 %v153, 7
    %v155 = vsub.s32 0, %v154
    %v156 = vrot.slane %v151, %v155
    %v157 = vlaneseq
    %v158 = vshrl.u32 %v157, 7
    %v159 = vsub.s32 1, %v158
    %v160 = vrot.slane %v151, %v159
    %v195 = vunpack.c.l.b16 %v119
    %v196 = vunpack.c.h.b16 %v119
    %v197 = vunpack.c.l.b16 %v120
    %v198 = vunpack.c.h.b16 %v120
    %v199 = vunpack.c.l.b16 %v121
    %v200 = vunpack.c.h.b16 %v121
    %v201 = vunpack.c.l.b16 %v122
    %v202 = vunpack.c.h.b16 %v122
    %v203 = vunpack.c.l.b16 %v123
    %v204 = vunpack.c.h.b16 %v123
    %v205 = vunpack.c.l.b16 %v124
    %v206 = vunpack.c.h.b16 %v124
    %v207 = vunpack.c.l.b16 %v125
    %v208 = vunpack.c.h.b16 %v125
    %v209 = vunpack.c.l.b16 %v126
    %v210 = vunpack.c.h.b16 %v126
    %v211 = vunpack.c.l.b16 %v127
    %v212 = vunpack.c.h.b16 %v127
    %v213 = vunpack.c.l.b16 %v128
    %v214 = vunpack.c.h.b16 %v128
    %v215 = vunpack.c.l.b16 %v129
    %v216 = vunpack.c.h.b16 %v129
    %v217 = vunpack.c.l.b16 %v130
    %v218 = vunpack.c.h.b16 %v130
    %v219 = vunpack.c.l.b16 %v131
    %v220 = vunpack.c.h.b16 %v131
    %v221 = vunpack.c.l.b16 %v132
    %v222 = vunpack.c.h.b16 %v132
    %v223 = vunpack.c.l.b16 %v133
    %v224 = vunpack.c.h.b16 %v133
    %v225 = vunpack.c.l.b16 %v134
    %v226 = vunpack.c.h.b16 %v134
    %v227 = vunpack.c.l.b16 %v135
    %v228 = vunpack.c.h.b16 %v135
    %v229 = vunpack.c.l.b16 %v136
    %v230 = vunpack.c.h.b16 %v136
    %v231 = vunpack.c.l.b16 %v137
    %v232 = vunpack.c.h.b16 %v137
    %v233 = vunpack.c.l.b16 %v138
    %v234 = vunpack.c.h.b16 %v138
    %v235 = vunpack.c.l.b16 %v139
    %v236 = vunpack.c.h.b16 %v139
    %v237 = vunpack.c.l.b16 %v140
    %v238 = vunpack.c.h.b16 %v140
    %v239 = vunpack.c.l.b16 %v141
    %v240 = vunpack.c.h.b16 %v141
    %v241 = vunpack.c.l.b16 %v142
    %v242 = vunpack.c.h.b16 %v142
    %v243 = vunpack.c.l.b16 %v143
    %v244 = vunpack.c.h.b16 %v143
    %v245 = vunpack.c.l.b16 %v144
    %v246 = vunpack.c.h.b16 %v144
    %v247 = vunpack.c.l.b16 %v145
    %v248 = vunpack.c.h.b16 %v145
    %v249 = vunpack.c.l.b16 %v146
    %v250 = vunpack.c.h.b16 %v146
    %v251 = vunpack.c.l.b16 %v147
    %v252 = vunpack.c.h.b16 %v147
    %v253 = vunpack.c.l.b16 %v148
    %v254 = vunpack.c.h.b16 %v148
    %v255 = vunpack.c.l.b16 %v149
    %v256 = vunpack.c.h.b16 %v149
    %v257 = vunpack.c.l.b16 %v150
    %v258 = vunpack.c.h.b16 %v150
    %v259 = vpack.c.b16 %v197, %v195
    %v260 = vpack.c.b16 %v198, %v196
    %v261 = vpack.c.b16 %v201, %v199
    %v262 = vpack.c.b16 %v202, %v200
    %v263 = vpack.c.b16 %v205, %v203
    %v264 = vpack.c.b16 %v206, %v204
    %v265 = vpack.c.b16 %v209, %v207
    %v266 = vpack.c.b16 %v210, %v208
    %v267 = vpack.c.b16 %v213, %v211
    %v268 = vpack.c.b16 %v214, %v212
    %v269 = vpack.c.b16 %v217, %v215
    %v270 = vpack.c.b16 %v218, %v216
    %v271 = vpack.c.b16 %v221, %v219
    %v272 = vpack.c.b16 %v222, %v220
    %v273 = vpack.c.b16 %v225, %v223
    %v274 = vpack.c.b16 %v226, %v224
    %v275 = vpack.c.b16 %v229, %v227
    %v276 = vpack.c.b16 %v230, %v228
    %v277 = vpack.c.b16 %v233, %v231
    %v278 = vpack.c.b16 %v234, %v232
    %v279 = vpack.c.b16 %v237, %v235
    %v280 = vpack.c.b16 %v238, %v236
    %v281 = vpack.c.b16 %v241, %v239
    %v282 = vpack.c.b16 %v242, %v240
    %v283 = vpack.c.b16 %v245, %v243
    %v284 = vpack.c.b16 %v246, %v244
    %v285 = vpack.c.b16 %v249, %v247
    %v286 = vpack.c.b16 %v250, %v248
    %v287 = vpack.c.b16 %v253, %v251
    %v288 = vpack.c.b16 %v254, %v252
    %v289 = vpack.c.b16 %v257, %v255
    %v290 = vpack.c.b16 %v258, %v256
    %323 = vmatprep.subr.bf16.mxu0 %v260
    %324 = vmatpush1.bf16.msra.mxu0 %v259
    %325 = vmatprep.subr.bf16.mxu0 %v262
    %326 = vmatpush1.bf16.msra.mxu0 %v261
    %327 = vmatprep.subr.bf16.mxu0 %v264
    %328 = vmatpush1.bf16.msra.mxu0 %v263
    %329 = vmatprep.subr.bf16.mxu0 %v266
    %330 = vmatpush1.bf16.msra.mxu0 %v265
    %331 = vmatprep.subr.bf16.mxu0 %v268
    %332 = vmatpush1.bf16.msra.mxu0 %v267
    %333 = vmatprep.subr.bf16.mxu0 %v270
    %334 = vmatpush1.bf16.msra.mxu0 %v269
    %335 = vmatprep.subr.bf16.mxu0 %v272
    %336 = vmatpush1.bf16.msra.mxu0 %v271
    %337 = vmatprep.subr.bf16.mxu0 %v274
    %338 = vmatpush1.bf16.msra.mxu0 %v273
    %339 = vmatprep.subr.bf16.mxu0 %v276
    %340 = vmatpush1.bf16.msra.mxu0 %v275
    %341 = vmatprep.subr.bf16.mxu0 %v278
    %342 = vmatpush1.bf16.msra.mxu0 %v277
    %343 = vmatprep.subr.bf16.mxu0 %v280
    %344 = vmatpush1.bf16.msra.mxu0 %v279
    %345 = vmatprep.subr.bf16.mxu0 %v282
    %346 = vmatpush1.bf16.msra.mxu0 %v281
    %347 = vmatprep.subr.bf16.mxu0 %v284
    %348 = vmatpush1.bf16.msra.mxu0 %v283
    %349 = vmatprep.subr.bf16.mxu0 %v286
    %350 = vmatpush1.bf16.msra.mxu0 %v285
    %351 = vmatprep.subr.bf16.mxu0 %v288
    %352 = vmatpush1.bf16.msra.mxu0 %v287
    %353 = vmatprep.subr.bf16.mxu0 %v290
    %354 = vmatpush1.bf16.msra.mxu0 %v289
    %355 = vmatprep.mubr.bf16.mxu0 %v118
    %356 = vmatmul.mubr.bf16.gmra.mrb[0].mxu0 %v117
    %v357 = vpop.f32.mrb[0].mxu0
    %v358 = vadd.f32 %v156, %v357
    %v359 = vpop.f32.mrb[0].mxu0
    %v360 = vadd.f32 %v160, %v359
    %v361 = vpop.f32.mrb[0].mxu0
    %v362 = vadd.f32 %v156, %v361
    %v363 = vpop.f32.mrb[0].mxu0
    %v364 = vadd.f32 %v160, %v363
    %365 = vdwg.mxu0
    %366 = vst [vmem:[#allocation2] sm:$0xff] %v358
    %367 = vst [vmem:[#allocation2 + $0x8] sm:$0xff] %v360
    %368 = vst [vmem:[#allocation2 + $0x10] sm:$0xff] %v362
    %369 = vst [vmem:[#allocation2 + $0x18] sm:$0xff] %v364
    // Predicated region
    $region26: #{fused_model.5} parent=1 // pred_check
      _
    $region27: #{fused_model.5} parent=1 // pred_check_branch
      %371 = sbr.rel (0) target = $region29
    $region28: #{fused_model.5} parent=1 // pred_region
      %s373 = ssub.s32 512, 512
      %374 = vsyncadd [#allocation3], %s373
      %s375 = sshll.u32 [#allocation2], 4
      %s376 = int_to_ptr.vmem [resolvable:$true] %s375
      %381 = dma.vmem_to_hbm [thread:$0]  %s376, 512, %s6, [#allocation3], 256, 256, 16
    $region29: #{fused_model.5} parent=1 // pred_fallthru
      _
    // Predicated region
    $region30: #{fused_model.5} parent=1 // pred_check
      _
    $region31: #{fused_model.5} parent=1 // pred_check_branch
      %383 = sbr.rel (0) target = $region33
    $region32: #{fused_model.5} parent=1 // pred_region
      %384 = dma.done [#allocation3], 512
    $region33: #{fused_model.5} parent=1 // pred_fallthru
      _
    %385 = vsyncpa [#allocation3], 1

// kernel: fused_model.4
$region0: #{fused_model.4}
  #allocation0 [shape = 'u32[]', space=smem, size = 0x4, offset = 0x4, fixed_abs, tag = 'smem constant byte address 0x4 - core index']
  #allocation1 [shape = 'u32[144,128]{1,0:T(1,128)}', space=vmem, size = 0x12000, scoped, tag = 'internal scratch']
  %s0 = inlined_call_operand.vmem [shape: f32[16,2048], index: 0, kind: input, shape index: {}]
  %s1 = inlined_call_operand.vmem [shape: f32[16,1], index: 1, kind: input, shape index: {}]
  %s2 = inlined_call_operand.vmem [shape: f32[16,1], index: 2, kind: input, shape index: {}]
  %s3 = inlined_call_operand.vmem [shape: f32[1,2048], index: 3, kind: input, shape index: {}]
  %s4 = inlined_call_operand.vmem [shape: f32[1,2048], index: 4, kind: input, shape index: {}]
  %s5 = inlined_call_operand.hbm [shape: bf16[2048,256], index: 5, kind: input, shape index: {}]
  %s6 = inlined_call_operand.vmem [shape: f32[16,256], index: 6, kind: output, shape index: {}]
  %s7 = sld [smem:[#allocation0]]
  $region122: #{fused_model.4} parent=0
    _
  %s9 = ssub.s32 1, %s7
  %s10 = scalar_select 0, %s9, %s7
  $region1: #{fused_model.4} parent=0
    #allocation2 [shape = 'u8[65536]{0}', space=vmem, size = 0x10000, scoped, tag = 'input window, operand 0']
    #allocation3 [shape = 'u8[262144]{0}', space=vmem, size = 0x40000, scoped, tag = 'input window, operand 5']
    #allocation4 [shape = 's32[2]{0}', space=sflag, size = 0x8, scoped, tag = 'scoped memory for fused_model.4']
    #allocation5 [shape = 'u8[16384]{0}', space=vmem, size = 0x4000, scoped, tag = 'output window, operand 0']
    %11 = vsyncpa [#allocation4], 0
    %s12 = scalar_lea.sflag [#allocation4], 1
    %13 = vsyncpa %s12, 0
    loop: start=0, step=1, limit=10
    $region2: #{fused_model.4} parent=1 // loop_pre_header
      _
    $region3: #{fused_model.4} parent=1 // loop_header
      %s15 = sphi 0, %s19
      %p16 = scmp.ge.s32.totalorder %s15, 10
      %s22 = sphi 0, %s41
      %s23 = sphi 0, %s37
      %s24 = sphi 0, %s33
      %s25 = sphi 0, %s22
      %s26 = sphi 0, %s23
      %s27 = sphi 0, %s24
      %s28 = sphi 0, %s25
      %s29 = sphi 0, %s26
      %s30 = sphi 0, %s27
      %s46 = sphi 0, %s48
      %s49 = sphi 0, %s46
      %s50 = sphi 0, %s49
      %s66 = sphi 0, %s50
      %s72 = sphi 0, %s74
      %s75 = sphi 0, %s72
      %s76 = sphi 0, %s75
      %s92 = sphi 0, %s76
      %s98 = sphi 0, %s100
      %s101 = sphi 0, %s98
      %s102 = sphi 0, %s101
      %s118 = sphi 0, %s102
      %s124 = sphi 0, %s126
      %s127 = sphi 0, %s124
      %s128 = sphi 0, %s127
      %s144 = sphi 0, %s128
      %s150 = sphi 0, %s152
      %s153 = sphi 0, %s150
      %s154 = sphi 0, %s153
      %s170 = sphi 0, %s154
      %s178 = sphi 0, %s180
      %s181 = sphi 0, %s178
      %s182 = sphi 0, %s181
      %s198 = sphi 0, %s182
      %s206 = sphi 0, %s208
      %s209 = sphi 0, %s206
      %s210 = sphi 0, %s209
      %s226 = sphi 0, %s210
    $region4: #{fused_model.4} parent=1 // loop_header_branch
      %18 = sbr.rel (%p16) target = $region8
    $region5: #{fused_model.4} parent=1 // loop_body
      %s20 = ssub.s32 %s15, 1
      %s21 = ssub.s32 %s15, 2
      %s31 = sadd.s32 1, %s24
      %p32 = scmp.ge.s32.totalorder %s31, 4
      %s33 = scalar_select %p32, 0, %s31
      %s34 = sadd.s32 1, %s23
      %s35 = scalar_select %p32, %s34, %s23
      %p36 = scmp.ge.s32.totalorder %s35, 2
      %s37 = scalar_select %p36, 0, %s35
      %s38 = sadd.s32 1, %s22
      %s39 = scalar_select %p36, %s38, %s22
      %p40 = scmp.ge.s32.totalorder %s39, 1
      %s41 = scalar_select %p40, 0, %s39
      %s42 = ssub.s32 %s22, %s41
      %s43 = ssub.s32 %s24, %s33
      %s44 = sor.u32 %s42, %s43
      %p45 = scmp.eq.s32.totalorder %s44, 0
      %s47 = sadd.s32 %s46, 1
      %s48 = scalar_select %p45, %s46, %s47
      %p51 = pneg %p45
      %p52 = scmp.eq.s32.totalorder %s15, 7
      %p53 = por %p51, %p52
      %p54 = scmp.ne.s32.totalorder %s46, %s49
      %p55 = scmp.eq.s32.totalorder %s15, 0
      %p56 = por %p54, %p55
      %p57 = scmp.ne.s32.totalorder %s46, %s49
      %p58 = scmp.eq.s32.totalorder %s20, 7
      %p59 = por %p57, %p58
      %p60 = scmp.ne.s32.totalorder %s49, %s50
      %p61 = scmp.eq.s32.totalorder %s20, 0
      %p62 = por %p60, %p61
      %p63 = scmp.ne.s32.totalorder %s49, %s50
      %p64 = scmp.eq.s32.totalorder %s21, 7
      %p65 = por %p63, %p64
      %p67 = scmp.ne.s32.totalorder %s50, %s66
      %p68 = scmp.eq.s32.totalorder %s21, 0
      %p69 = por %p67, %p68
      %s70 = ssub.s32 %s22, %s41
      %p71 = scmp.eq.s32.totalorder %s70, 0
      %s73 = sadd.s32 %s72, 1
      %s74 = scalar_select %p71, %s72, %s73
      %p77 = pneg %p71
      %p78 = scmp.eq.s32.totalorder %s15, 7
      %p79 = por %p77, %p78
      %p80 = scmp.ne.s32.totalorder %s72, %s75
      %p81 = scmp.eq.s32.totalorder %s15, 0
      %p82 = por %p80, %p81
      %p83 = scmp.ne.s32.totalorder %s72, %s75
      %p84 = scmp.eq.s32.totalorder %s20, 7
      %p85 = por %p83, %p84
      %p86 = scmp.ne.s32.totalorder %s75, %s76
      %p87 = scmp.eq.s32.totalorder %s20, 0
      %p88 = por %p86, %p87
      %p89 = scmp.ne.s32.totalorder %s75, %s76
      %p90 = scmp.eq.s32.totalorder %s21, 7
      %p91 = por %p89, %p90
      %p93 = scmp.ne.s32.totalorder %s76, %s92
      %p94 = scmp.eq.s32.totalorder %s21, 0
      %p95 = por %p93, %p94
      %s96 = ssub.s32 %s22, %s41
      %p97 = scmp.eq.s32.totalorder %s96, 0
      %s99 = sadd.s32 %s98, 1
      %s100 = scalar_select %p97, %s98, %s99
      %p103 = pneg %p97
      %p104 = scmp.eq.s32.totalorder %s15, 7
      %p105 = por %p103, %p104
      %p106 = scmp.ne.s32.totalorder %s98, %s101
      %p107 = scmp.eq.s32.totalorder %s15, 0
      %p108 = por %p106, %p107
      %p109 = scmp.ne.s32.totalorder %s98, %s101
      %p110 = scmp.eq.s32.totalorder %s20, 7
      %p111 = por %p109, %p110
      %p112 = scmp.ne.s32.totalorder %s101, %s102
      %p113 = scmp.eq.s32.totalorder %s20, 0
      %p114 = por %p112, %p113
      %p115 = scmp.ne.s32.totalorder %s101, %s102
      %p116 = scmp.eq.s32.totalorder %s21, 7
      %p117 = por %p115, %p116
      %p119 = scmp.ne.s32.totalorder %s102, %s118
      %p120 = scmp.eq.s32.totalorder %s21, 0
      %p121 = por %p119, %p120
      %s122 = ssub.s32 %s24, %s33
      %p123 = scmp.eq.s32.totalorder %s122, 0
      %s125 = sadd.s32 %s124, 1
      %s126 = scalar_select %p123, %s124, %s125
      %p129 = pneg %p123
      %p130 = scmp.eq.s32.totalorder %s15, 7
      %p131 = por %p129, %p130
      %p132 = scmp.ne.s32.totalorder %s124, %s127
      %p133 = scmp.eq.s32.totalorder %s15, 0
      %p134 = por %p132, %p133
      %p135 = scmp.ne.s32.totalorder %s124, %s127
      %p136 = scmp.eq.s32.totalorder %s20, 7
      %p137 = por %p135, %p136
      %p138 = scmp.ne.s32.totalorder %s127, %s128
      %p139 = scmp.eq.s32.totalorder %s20, 0
      %p140 = por %p138, %p139
      %p141 = scmp.ne.s32.totalorder %s127, %s128
      %p142 = scmp.eq.s32.totalorder %s21, 7
      %p143 = por %p141, %p142
      %p145 = scmp.ne.s32.totalorder %s128, %s144
      %p146 = scmp.eq.s32.totalorder %s21, 0
      %p147 = por %p145, %p146
      %s148 = ssub.s32 %s24, %s33
      %p149 = scmp.eq.s32.totalorder %s148, 0
      %s151 = sadd.s32 %s150, 1
      %s152 = scalar_select %p149, %s150, %s151
      %p155 = pneg %p149
      %p156 = scmp.eq.s32.totalorder %s15, 7
      %p157 = por %p155, %p156
      %p158 = scmp.ne.s32.totalorder %s150, %s153
      %p159 = scmp.eq.s32.totalorder %s15, 0
      %p160 = por %p158, %p159
      %p161 = scmp.ne.s32.totalorder %s150, %s153
      %p162 = scmp.eq.s32.totalorder %s20, 7
      %p163 = por %p161, %p162
      %p164 = scmp.ne.s32.totalorder %s153, %s154
      %p165 = scmp.eq.s32.totalorder %s20, 0
      %p166 = por %p164, %p165
      %p167 = scmp.ne.s32.totalorder %s153, %s154
      %p168 = scmp.eq.s32.totalorder %s21, 7
      %p169 = por %p167, %p168
      %p171 = scmp.ne.s32.totalorder %s154, %s170
      %p172 = scmp.eq.s32.totalorder %s21, 0
      %p173 = por %p171, %p172
      %s174 = ssub.s32 %s24, %s33
      %s175 = ssub.s32 %s23, %s37
      %s176 = sor.u32 %s174, %s175
      %p177 = scmp.eq.s32.totalorder %s176, 0
      %s179 = sadd.s32 %s178, 1
      %s180 = scalar_select %p177, %s178, %s179
      %p183 = pneg %p177
      %p184 = scmp.eq.s32.totalorder %s15, 7
      %p185 = por %p183, %p184
      %p186 = scmp.ne.s32.totalorder %s178, %s181
      %p187 = scmp.eq.s32.totalorder %s15, 0
      %p188 = por %p186, %p187
      %p189 = scmp.ne.s32.totalorder %s178, %s181
      %p190 = scmp.eq.s32.totalorder %s20, 7
      %p191 = por %p189, %p190
      %p192 = scmp.ne.s32.totalorder %s181, %s182
      %p193 = scmp.eq.s32.totalorder %s20, 0
      %p194 = por %p192, %p193
      %p195 = scmp.ne.s32.totalorder %s181, %s182
      %p196 = scmp.eq.s32.totalorder %s21, 7
      %p197 = por %p195, %p196
      %p199 = scmp.ne.s32.totalorder %s182, %s198
      %p200 = scmp.eq.s32.totalorder %s21, 0
      %p201 = por %p199, %p200
      %s202 = ssub.s32 %s22, %s41
      %s203 = ssub.s32 %s23, %s37
      %s204 = sor.u32 %s202, %s203
      %p205 = scmp.eq.s32.totalorder %s204, 0
      %s207 = sadd.s32 %s206, 1
      %s208 = scalar_select %p205, %s206, %s207
      %p211 = pneg %p205
      %p212 = scmp.eq.s32.totalorder %s15, 7
      %p213 = por %p211, %p212
      %p214 = scmp.ne.s32.totalorder %s206, %s209
      %p215 = scmp.eq.s32.totalorder %s15, 0
      %p216 = por %p214, %p215
      %p217 = scmp.ne.s32.totalorder %s206, %s209
      %p218 = scmp.eq.s32.totalorder %s20, 7
      %p219 = por %p217, %p218
      %p220 = scmp.ne.s32.totalorder %s209, %s210
      %p221 = scmp.eq.s32.totalorder %s20, 0
      %p222 = por %p220, %p221
      %p223 = scmp.ne.s32.totalorder %s209, %s210
      %p224 = scmp.eq.s32.totalorder %s21, 7
      %p225 = por %p223, %p224
      %p227 = scmp.ne.s32.totalorder %s210, %s226
      %p228 = scmp.eq.s32.totalorder %s21, 0
      %p229 = por %p227, %p228
      %p230 = scmp.le.s32.totalorder 1, %s15
      %p231 = scmp.lt.s32.totalorder %s15, 9
      %p232 = pnand %p230, %p231
      %p233 = pneg %p232
      // Predicated region
      $region9: #{fused_model.4} parent=5 // pred_check
        _
      $region10: #{fused_model.4} parent=5 // pred_check_branch
        %235 = sbr.rel (%p232) target = $region12
      $region11: #{fused_model.4} parent=5 // pred_region
        %s236 = ssub.s32 %s15, 1
        // Predicated region
        $region13: #{fused_model.4} parent=11 // pred_check
          %p237 = pneg %p88
        $region14: #{fused_model.4} parent=11 // pred_check_branch
          %239 = sbr.rel (%p237) target = $region16
        $region15: #{fused_model.4} parent=11 // pred_region
          %s240 = smul.u32 2, %s25
          %p241 = scmp.lt.s32.totalorder %s240, 1
          %s242 = scalar_select %p241, %s240, 1
          %s243 = smul.addr %s242, 8
          %s244 = scalar_lea.vmem %s1, %s243
          %s245 = smul.u32 2, %s25
        $region16: #{fused_model.4} parent=11 // pred_fallthru
          _
        // Predicated region
        $region17: #{fused_model.4} parent=11 // pred_check
          %p246 = pneg %p114
        $region18: #{fused_model.4} parent=11 // pred_check_branch
          %248 = sbr.rel (%p246) target = $region20
        $region19: #{fused_model.4} parent=11 // pred_region
          %s249 = smul.u32 2, %s25
          %p250 = scmp.lt.s32.totalorder %s249, 1
          %s251 = scalar_select %p250, %s249, 1
          %s252 = smul.addr %s251, 8
          %s253 = scalar_lea.vmem %s2, %s252
          %s254 = smul.u32 2, %s25
        $region20: #{fused_model.4} parent=11 // pred_fallthru
          _
      $region12: #{fused_model.4} parent=5 // pred_fallthru
        _
      %p255 = scmp.lt.s32.totalorder %s15, 8
      // Predicated region
      $region21: #{fused_model.4} parent=5 // pred_check
        %p256 = pneg %p255
      $region22: #{fused_model.4} parent=5 // pred_check_branch
        %258 = sbr.rel (%p256) target = $region24
      $region23: #{fused_model.4} parent=5 // pred_region
        // Predicated region
        $region25: #{fused_model.4} parent=23 // pred_check
          %p259 = pneg %p56
        $region26: #{fused_model.4} parent=23 // pred_check_branch
          %261 = sbr.rel (%p259) target = $region28
        $region27: #{fused_model.4} parent=23 // pred_region
          %s262 = sand.u32 %s46, 1
          %s263 = sand.u32 %s46, 1
          %s264 = smul.addr %s263, 64
          %s265 = scalar_lea.vmem [#allocation2], %s264
          %s266 = smul.u32 2, %s22
          %s267 = smul.u32 4, %s24
          %s268 = smul.addr %s266, 16
          %s269 = sadd.s32 %s267, %s268
          %s270 = smul.addr %s269, 8
          %s271 = scalar_lea.vmem %s0, %s270
          // Predicated region
          $region29: #{fused_model.4} parent=27 // pred_check
            _
          $region30: #{fused_model.4} parent=27 // pred_check_branch
            %273 = sbr.rel (0) target = $region32
          $region31: #{fused_model.4} parent=27 // pred_region
            // Predicated region
            $region33: #{fused_model.4} parent=31 // pred_check
              _
            $region34: #{fused_model.4} parent=31 // pred_check_branch
              %275 = sbr.rel (0) target = $region36
            $region35: #{fused_model.4} parent=31 // pred_region
              loop: start=0, step=1, limit=1
              $region37: #{fused_model.4} parent=35 // loop_pre_header
                _
              $region38: #{fused_model.4} parent=35 // loop_header
                %s277 = sphi 0, %s281
                %p278 = scmp.ge.s32.totalorder %s277, 1
                %s282 = sphi %s271, %s271
                %s283 = sphi %s265, %s265
              $region39: #{fused_model.4} parent=35 // loop_header_branch
                %280 = sbr.rel (%p278) target = $region43
              $region40: #{fused_model.4} parent=35 // loop_body
                %v284 = vld [vmem:[%s282] sm:$0xff]
                %285 = vst [vmem:[%s283] sm:$0xff] %v284
                %v286 = vld [vmem:[%s282 + $0x8] sm:$0xff]
                %287 = vst [vmem:[%s283 + $0x8] sm:$0xff] %v286
                %v288 = vld [vmem:[%s282 + $0x10] sm:$0xff]
                %289 = vst [vmem:[%s283 + $0x10] sm:$0xff] %v288
                %v290 = vld [vmem:[%s282 + $0x18] sm:$0xff]
                %291 = vst [vmem:[%s283 + $0x18] sm:$0xff] %v290
                %v292 = vld [vmem:[%s282 + $0x80] sm:$0xff]
                %293 = vst [vmem:[%s283 + $0x20] sm:$0xff] %v292
                %v294 = vld [vmem:[%s282 + $0x88] sm:$0xff]
                %295 = vst [vmem:[%s283 + $0x28] sm:$0xff] %v294
                %v296 = vld [vmem:[%s282 + $0x90] sm:$0xff]
                %297 = vst [vmem:[%s283 + $0x30] sm:$0xff] %v296
                %v298 = vld [vmem:[%s282 + $0x98] sm:$0xff]
                %299 = vst [vmem:[%s283 + $0x38] sm:$0xff] %v298
              $region41: #{fused_model.4} parent=35 // loop_footer
                %s281 = sadd.s32 1, %s277
              $region42: #{fused_model.4} parent=35 // loop_footer_branch
                %276 = sbr.rel target = $region38
              $region43: #{fused_model.4} parent=35 // loop_exit
                _
            $region36: #{fused_model.4} parent=31 // pred_fallthru
              _
            // Predicated region
            $region44: #{fused_model.4} parent=31 // pred_check
              _
            $region45: #{fused_model.4} parent=31 // pred_check_branch
              %301 = sbr.rel target = $region47
            $region46: #{fused_model.4} parent=31 // pred_region
              _
            $region47: #{fused_model.4} parent=31 // pred_fallthru
              _
          $region32: #{fused_model.4} parent=27 // pred_fallthru
            _
          %302 = vnop
        $region28: #{fused_model.4} parent=23 // pred_fallthru
          _
        // Predicated region
        $region48: #{fused_model.4} parent=23 // pred_check
          %p303 = pneg %p134
        $region49: #{fused_model.4} parent=23 // pred_check_branch
          %305 = sbr.rel (%p303) target = $region51
        $region50: #{fused_model.4} parent=23 // pred_region
          %s306 = smul.u32 4, %s24
          %p307 = scmp.lt.s32.totalorder %s306, 15
          %s308 = scalar_select %p307, %s306, 15
          %s309 = scalar_lea.vmem %s3, %s308
          %s310 = smul.u32 4, %s24
        $region51: #{fused_model.4} parent=23 // pred_fallthru
          _
        // Predicated region
        $region52: #{fused_model.4} parent=23 // pred_check
          %p311 = pneg %p160
        $region53: #{fused_model.4} parent=23 // pred_check_branch
          %313 = sbr.rel (%p311) target = $region55
        $region54: #{fused_model.4} parent=23 // pred_region
          %s314 = smul.u32 4, %s24
          %p315 = scmp.lt.s32.totalorder %s314, 15
          %s316 = scalar_select %p315, %s314, 15
          %s317 = scalar_lea.vmem %s4, %s316
          %s318 = smul.u32 4, %s24
        $region55: #{fused_model.4} parent=23 // pred_fallthru
          _
        // Predicated region
        $region56: #{fused_model.4} parent=23 // pred_check
          %p319 = pneg %p188
        $region57: #{fused_model.4} parent=23 // pred_check_branch
          %321 = sbr.rel (%p319) target = $region59
        $region58: #{fused_model.4} parent=23 // pred_region
          %s322 = sand.u32 %s178, 1
          %s323 = scalar_lea.sflag [#allocation4], %s322
          %s324 = sand.u32 %s178, 1
          %s325 = smul.addr %s324, 256
          %s326 = scalar_lea.vmem [#allocation3], %s325
          %s327 = smul.u32 64, %s24
          %s329 = ssub.s32 4096, 4096
          %330 = vsyncadd %s323, %s329
          %s331 = smul.addr %s327, 2
          %s332 = sadd.s32 %s23, %s331
          %s333 = smul.addr %s332, 64
          %s334 = scalar_lea.hbm %s5, %s333
          %s335 = sshll.u32 %s326, 4
          %s336 = int_to_ptr.vmem [resolvable:$true] %s335
          %341 = dma.hbm_to_vmem [thread:$0]  %s334, 4096, %s336, %s323, 128, 64, 4
        $region59: #{fused_model.4} parent=23 // pred_fallthru
          _
      $region24: #{fused_model.4} parent=5 // pred_fallthru
        _
      %p342 = scmp.le.s32.totalorder 1, %s15
      %p343 = scmp.lt.s32.totalorder %s15, 9
      %p344 = pnand %p342, %p343
      %p345 = pneg %p344
      // Predicated region
      $region60: #{fused_model.4} parent=5 // pred_check
        _
      $region61: #{fused_model.4} parent=5 // pred_check_branch
        %347 = sbr.rel (%p344) target = $region63
      $region62: #{fused_model.4} parent=5 // pred_region
        %s348 = ssub.s32 %s15, 1
        %s349 = sand.u32 %s49, 1
        %s350 = sand.u32 %s49, 1
        %s351 = smul.addr %s350, 64
        %s352 = scalar_lea.vmem [#allocation2], %s351
        // Predicated region
        $region64: #{fused_model.4} parent=62 // pred_check
          %p353 = pneg %p62
        $region65: #{fused_model.4} parent=62 // pred_check_branch
          %355 = sbr.rel (%p353) target = $region67
        $region66: #{fused_model.4} parent=62 // pred_region
          _
        $region67: #{fused_model.4} parent=62 // pred_fallthru
          _
        %s356 = sand.u32 %s181, 1
        %s357 = scalar_lea.sflag [#allocation4], %s356
        %s358 = sand.u32 %s181, 1
        %s359 = smul.addr %s358, 256
        %s360 = scalar_lea.vmem [#allocation3], %s359
        // Predicated region
        $region68: #{fused_model.4} parent=62 // pred_check
          %p361 = pneg %p194
        $region69: #{fused_model.4} parent=62 // pred_check_branch
          %363 = sbr.rel (%p361) target = $region71
        $region70: #{fused_model.4} parent=62 // pred_region
          %364 = dma.done %s357, 4096
        $region71: #{fused_model.4} parent=62 // pred_fallthru
          _
        %s365 = sand.u32 %s49, 1
        %s366 = sand.u32 %s49, 1
        %s367 = smul.addr %s366, 64
        %s368 = scalar_lea.vmem [#allocation2], %s367
        %p369 = pneg %p62
        %p370 = pneg %p59
        %s371 = smul.u32 2, %s25
        %p372 = scmp.lt.s32.totalorder %s371, 1
        %s373 = scalar_select %p372, %s371, 1
        %s374 = smul.addr %s373, 8
        %s375 = scalar_lea.vmem %s1, %s374
        %p376 = pneg %p88
        %p377 = pneg %p85
        %s378 = smul.u32 2, %s25
        %p379 = scmp.lt.s32.totalorder %s378, 1
        %s380 = scalar_select %p379, %s378, 1
        %s381 = smul.addr %s380, 8
        %s382 = scalar_lea.vmem %s2, %s381
        %p383 = pneg %p114
        %p384 = pneg %p111
        %s385 = smul.u32 4, %s27
        %p386 = scmp.lt.s32.totalorder %s385, 15
        %s387 = scalar_select %p386, %s385, 15
        %s388 = scalar_lea.vmem %s3, %s387
        %p389 = pneg %p140
        %p390 = pneg %p137
        %s391 = smul.u32 4, %s27
        %p392 = scmp.lt.s32.totalorder %s391, 15
        %s393 = scalar_select %p392, %s391, 15
        %s394 = scalar_lea.vmem %s4, %s393
        %p395 = pneg %p166
        %p396 = pneg %p163
        %s397 = sand.u32 %s181, 1
        %s398 = scalar_lea.sflag [#allocation4], %s397
        %s399 = sand.u32 %s181, 1
        %s400 = smul.addr %s399, 256
        %s401 = scalar_lea.vmem [#allocation3], %s400
        %p402 = pneg %p194
        %p403 = pneg %p191
        %p404 = pneg %p222
        %p405 = pneg %p219
        %s406 = sand.u32 %s209, 1
        %s407 = sand.u32 %s209, 1
        %s408 = smul.addr %s407, 16
        %s409 = scalar_lea.vmem [#allocation5], %s408
        %s410 = smul.u32 2, %s25
        %s411 = smul.u32 4, %s27
        %s412 = smul.u32 2, %s25
        %p413 = scmp.lt.s32.totalorder %s412, 1
        %s414 = scalar_select %p413, %s412, 1
        %s415 = smul.addr %s414, 8
        %s416 = scalar_lea.vmem %s1, %s415
        %s417 = smul.u32 2, %s25
        %s418 = smul.u32 2, %s25
        %p419 = scmp.lt.s32.totalorder %s418, 1
        %s420 = scalar_select %p419, %s418, 1
        %s421 = smul.addr %s420, 8
        %s422 = scalar_lea.vmem %s2, %s421
        %s423 = smul.u32 2, %s25
        %s424 = smul.u32 4, %s27
        %p425 = scmp.lt.s32.totalorder %s424, 15
        %s426 = scalar_select %p425, %s424, 15
        %s427 = scalar_lea.vmem %s3, %s426
        %s428 = smul.u32 4, %s27
        %s429 = smul.u32 4, %s27
        %p430 = scmp.lt.s32.totalorder %s429, 15
        %s431 = scalar_select %p430, %s429, 15
        %s432 = scalar_lea.vmem %s4, %s431
        %s433 = smul.u32 4, %s27
        %s434 = smul.u32 64, %s27
        %s435 = smul.u32 2, %s25
        %p437 = scmp.eq.s32.totalorder %s27, 0
        // Predicated region
        $region72: #{fused_model.4} parent=62 // pred_check
          %p438 = pneg %p437
        $region73: #{fused_model.4} parent=62 // pred_check_branch
          %440 = sbr.rel (%p438) target = $region75
        $region74: #{fused_model.4} parent=62 // pred_region
          %441 = vst [vmem:[%s409] sm:$0xff] 0.0
          %442 = vst [vmem:[%s409 + $0x8] sm:$0xff] 0.0
        $region75: #{fused_model.4} parent=62 // pred_fallthru
          _
        %v443 = vld [vmem:[%s352] sm:$0xff]
        %v444 = vld [vmem:[%s352 + $0x8] sm:$0xff]
        %v445 = vld [vmem:[%s352 + $0x10] sm:$0xff]
        %v446 = vld [vmem:[%s352 + $0x18] sm:$0xff]
        %v447 = vld [vmem:[%s352 + $0x20] sm:$0xff]
        %v448 = vld [vmem:[%s352 + $0x28] sm:$0xff]
        %v449 = vld [vmem:[%s352 + $0x30] sm:$0xff]
        %v450 = vld [vmem:[%s352 + $0x38] sm:$0xff]
        %v451 = vld [vmem:[%s416] sm:$0xff]
        %v452 = vld [vmem:[%s416 + $0x8] sm:$0xff]
        %454 = vset.pattern.permute.xlu0 0
        %455 = vperm.xlu0 %454, %v451
        %v456 = vpop.permute.xlu0 %455
        %459 = vset.pattern.permute.xlu0 0
        %460 = vperm.xlu0 %459, %v452
        %v461 = vpop.permute.xlu0 %460
        %v463 = vsub.f32 %v443, %v456
        %v464 = vsub.f32 %v444, %v456
        %v465 = vsub.f32 %v445, %v456
        %v466 = vsub.f32 %v446, %v456
        %v467 = vsub.f32 %v447, %v461
        %v468 = vsub.f32 %v448, %v461
        %v469 = vsub.f32 %v449, %v461
        %v470 = vsub.f32 %v450, %v461
        %v471 = vld [vmem:[%s422] sm:$0xff]
        %v472 = vld [vmem:[%s422 + $0x8] sm:$0xff]
        %474 = vset.pattern.permute.xlu0 0
        %475 = vperm.xlu0 %474, %v471
        %v476 = vpop.permute.xlu0 %475
        %479 = vset.pattern.permute.xlu0 0
        %480 = vperm.xlu0 %479, %v472
        %v481 = vpop.permute.xlu0 %480
        %v483 = vmul.f32 %v463, %v476
        %v484 = vmul.f32 %v464, %v476
        %v485 = vmul.f32 %v465, %v476
        %v486 = vmul.f32 %v466, %v476
        %v487 = vmul.f32 %v467, %v481
        %v488 = vmul.f32 %v468, %v481
        %v489 = vmul.f32 %v469, %v481
        %v490 = vmul.f32 %v470, %v481
        %v491 = vld [vmem:[%s427] sm:$0xf]
        %v493 = vlaneseq
        %v494 = vshrl.u32 %v493, 7
        %v495 = vsub.s32 0, %v494
        %v496 = vrot.slane %v491, %v495
        %v497 = vlaneseq
        %v498 = vshrl.u32 %v497, 7
        %v499 = vsub.s32 1, %v498
        %v500 = vrot.slane %v491, %v499
        %v501 = vlaneseq
        %v502 = vshrl.u32 %v501, 7
        %v503 = vsub.s32 2, %v502
        %v504 = vrot.slane %v491, %v503
        %v505 = vlaneseq
        %v506 = vshrl.u32 %v505, 7
        %v507 = vsub.s32 3, %v506
        %v508 = vrot.slane %v491, %v507
        %v513 = vmul.f32 %v483, %v496
        %v514 = vmul.f32 %v484, %v500
        %v515 = vmul.f32 %v485, %v504
        %v516 = vmul.f32 %v486, %v508
        %v517 = vmul.f32 %v487, %v496
        %v518 = vmul.f32 %v488, %v500
        %v519 = vmul.f32 %v489, %v504
        %v520 = vmul.f32 %v490, %v508
        %v521 = vld [vmem:[%s432] sm:$0xf]
        %v523 = vlaneseq
        %v524 = vshrl.u32 %v523, 7
        %v525 = vsub.s32 0, %v524
        %v526 = vrot.slane %v521, %v525
        %v527 = vlaneseq
        %v528 = vshrl.u32 %v527, 7
        %v529 = vsub.s32 1, %v528
        %v530 = vrot.slane %v521, %v529
        %v531 = vlaneseq
        %v532 = vshrl.u32 %v531, 7
        %v533 = vsub.s32 2, %v532
        %v534 = vrot.slane %v521, %v533
        %v535 = vlaneseq
        %v536 = vshrl.u32 %v535, 7
        %v537 = vsub.s32 3, %v536
        %v538 = vrot.slane %v521, %v537
        %v543 = vadd.f32 %v513, %v526
        %v544 = vadd.f32 %v514, %v530
        %v545 = vadd.f32 %v515, %v534
        %v546 = vadd.f32 %v516, %v538
        %v547 = vadd.f32 %v517, %v526
        %v548 = vadd.f32 %v518, %v530
        %v549 = vadd.f32 %v519, %v534
        %v550 = vadd.f32 %v520, %v538
        %v551 = vxor.u32 %v543, 2147483648
        %v552 = vxor.u32 %v544, 2147483648
        %v553 = vxor.u32 %v545, 2147483648
        %v554 = vxor.u32 %v546, 2147483648
        %v555 = vxor.u32 %v547, 2147483648
        %v556 = vxor.u32 %v548, 2147483648
        %v557 = vxor.u32 %v549, 2147483648
        %v558 = vxor.u32 %v550, 2147483648
        %v559 = vmul.f32 %v551, 1.442695
        %v560 = vpow.pop %v559
        %v561 = vmul.f32 %v552, 1.442695
        %v562 = vpow.pop %v561
        %v563 = vmul.f32 %v553, 1.442695
        %v564 = vpow.pop %v563
        %v565 = vmul.f32 %v554, 1.442695
        %v566 = vpow.pop %v565
        %v567 = vmul.f32 %v555, 1.442695
        %v568 = vpow.pop %v567
        %v569 = vmul.f32 %v556, 1.442695
        %v570 = vpow.pop %v569
        %v571 = vmul.f32 %v557, 1.442695
        %v572 = vpow.pop %v571
        %v573 = vmul.f32 %v558, 1.442695
        %v574 = vpow.pop %v573
        %v575 = vadd.f32 %v560, 1.0
        %v576 = vadd.f32 %v562, 1.0
        %v577 = vadd.f32 %v564, 1.0
        %v578 = vadd.f32 %v566, 1.0
        %v579 = vadd.f32 %v568, 1.0
        %v580 = vadd.f32 %v570, 1.0
        %v581 = vadd.f32 %v572, 1.0
        %v582 = vadd.f32 %v574, 1.0
        %v583 = vrcp.pop %v575
        %v584 = vmul.f32 1.0, %v583
        %v585 = vrcp.pop %v576
        %v586 = vmul.f32 1.0, %v585
        %v587 = vrcp.pop %v577
        %v588 = vmul.f32 1.0, %v587
        %v589 = vrcp.pop %v578
        %v590 = vmul.f32 1.0, %v589
        %v591 = vrcp.pop %v579
        %v592 = vmul.f32 1.0, %v591
        %v593 = vrcp.pop %v580
        %v594 = vmul.f32 1.0, %v593
        %v595 = vrcp.pop %v581
        %v596 = vmul.f32 1.0, %v595
        %v597 = vrcp.pop %v582
        %v598 = vmul.f32 1.0, %v597
        %v599 = vld [vmem:[%s409] sm:$0xff]
        %v600 = vld [vmem:[%s409 + $0x8] sm:$0xff]
        %v601 = vpack.c.bf16 %v592, %v584
        %v602 = vpack.c.bf16 %v594, %v586
        %v603 = vpack.c.bf16 %v596, %v588
        %v604 = vpack.c.bf16 %v598, %v590
        %v605 = vld [vmem:[%s360] sm:$0xf]
        %v606 = vld [vmem:[%s360 + $0x4] sm:$0xf]
        %v607 = vld [vmem:[%s360 + $0x8] sm:$0xf]
        %v608 = vld [vmem:[%s360 + $0xc] sm:$0xf]
        %v609 = vld [vmem:[%s360 + $0x10] sm:$0xf]
        %v610 = vld [vmem:[%s360 + $0x14] sm:$0xf]
        %v611 = vld [vmem:[%s360 + $0x18] sm:$0xf]
        %v612 = vld [vmem:[%s360 + $0x1c] sm:$0xf]
        %v613 = vld [vmem:[%s360 + $0x20] sm:$0xf]
        %v614 = vld [vmem:[%s360 + $0x24] sm:$0xf]
        %v615 = vld [vmem:[%s360 + $0x28] sm:$0xf]
        %v616 = vld [vmem:[%s360 + $0x2c] sm:$0xf]
        %v617 = vld [vmem:[%s360 + $0x30] sm:$0xf]
        %v618 = vld [vmem:[%s360 + $0x34] sm:$0xf]
        %v619 = vld [vmem:[%s360 + $0x38] sm:$0xf]
        %v620 = vld [vmem:[%s360 + $0x3c] sm:$0xf]
        %v621 = vld [vmem:[%s360 + $0x40] sm:$0xf]
        %v622 = vld [vmem:[%s360 + $0x44] sm:$0xf]
        %v623 = vld [vmem:[%s360 + $0x48] sm:$0xf]
        %v624 = vld [vmem:[%s360 + $0x4c] sm:$0xf]
        %v625 = vld [vmem:[%s360 + $0x50] sm:$0xf]
        %v626 = vld [vmem:[%s360 + $0x54] sm:$0xf]
        %v627 = vld [vmem:[%s360 + $0x58] sm:$0xf]
        %v628 = vld [vmem:[%s360 + $0x5c] sm:$0xf]
        %v629 = vld [vmem:[%s360 + $0x60] sm:$0xf]
        %v630 = vld [vmem:[%s360 + $0x64] sm:$0xf]
        %v631 = vld [vmem:[%s360 + $0x68] sm:$0xf]
        %v632 = vld [vmem:[%s360 + $0x6c] sm:$0xf]
        %v633 = vld [vmem:[%s360 + $0x70] sm:$0xf]
        %v634 = vld [vmem:[%s360 + $0x74] sm:$0xf]
        %v635 = vld [vmem:[%s360 + $0x78] sm:$0xf]
        %v636 = vld [vmem:[%s360 + $0x7c] sm:$0xf]
        %v637 = vld [vmem:[%s360 + $0x80] sm:$0xf]
        %v638 = vld [vmem:[%s360 + $0x84] sm:$0xf]
        %v639 = vld [vmem:[%s360 + $0x88] sm:$0xf]
        %v640 = vld [vmem:[%s360 + $0x8c] sm:$0xf]
        %v641 = vld [vmem:[%s360 + $0x90] sm:$0xf]
        %v642 = vld [vmem:[%s360 + $0x94] sm:$0xf]
        %v643 = vld [vmem:[%s360 + $0x98] sm:$0xf]
        %v644 = vld [vmem:[%s360 + $0x9c] sm:$0xf]
        %v645 = vld [vmem:[%s360 + $0xa0] sm:$0xf]
        %v646 = vld [vmem:[%s360 + $0xa4] sm:$0xf]
        %v647 = vld [vmem:[%s360 + $0xa8] sm:$0xf]
        %v648 = vld [vmem:[%s360 + $0xac] sm:$0xf]
        %v649 = vld [vmem:[%s360 + $0xb0] sm:$0xf]
        %v650 = vld [vmem:[%s360 + $0xb4] sm:$0xf]
        %v651 = vld [vmem:[%s360 + $0xb8] sm:$0xf]
        %v652 = vld [vmem:[%s360 + $0xbc] sm:$0xf]
        %v653 = vld [vmem:[%s360 + $0xc0] sm:$0xf]
        %v654 = vld [vmem:[%s360 + $0xc4] sm:$0xf]
        %v655 = vld [vmem:[%s360 + $0xc8] sm:$0xf]
        %v656 = vld [vmem:[%s360 + $0xcc] sm:$0xf]
        %v657 = vld [vmem:[%s360 + $0xd0] sm:$0xf]
        %v658 = vld [vmem:[%s360 + $0xd4] sm:$0xf]
        %v659 = vld [vmem:[%s360 + $0xd8] sm:$0xf]
        %v660 = vld [vmem:[%s360 + $0xdc] sm:$0xf]
        %v661 = vld [vmem:[%s360 + $0xe0] sm:$0xf]
        %v662 = vld [vmem:[%s360 + $0xe4] sm:$0xf]
        %v663 = vld [vmem:[%s360 + $0xe8] sm:$0xf]
        %v664 = vld [vmem:[%s360 + $0xec] sm:$0xf]
        %v665 = vld [vmem:[%s360 + $0xf0] sm:$0xf]
        %v666 = vld [vmem:[%s360 + $0xf4] sm:$0xf]
        %v667 = vld [vmem:[%s360 + $0xf8] sm:$0xf]
        %v668 = vld [vmem:[%s360 + $0xfc] sm:$0xf]
        %v733 = vunpack.c.l.b16 %v605
        %v734 = vunpack.c.l.b16 %v606
        %v735 = vunpack.c.l.b16 %v607
        %v736 = vunpack.c.l.b16 %v608
        %v737 = vunpack.c.l.b16 %v609
        %v738 = vunpack.c.l.b16 %v610
        %v739 = vunpack.c.l.b16 %v611
        %v740 = vunpack.c.l.b16 %v612
        %v741 = vunpack.c.l.b16 %v613
        %v742 = vunpack.c.l.b16 %v614
        %v743 = vunpack.c.l.b16 %v615
        %v744 = vunpack.c.l.b16 %v616
        %v745 = vunpack.c.l.b16 %v617
        %v746 = vunpack.c.l.b16 %v618
        %v747 = vunpack.c.l.b16 %v619
        %v748 = vunpack.c.l.b16 %v620
        %v749 = vunpack.c.l.b16 %v621
        %v750 = vunpack.c.l.b16 %v622
        %v751 = vunpack.c.l.b16 %v623
        %v752 = vunpack.c.l.b16 %v624
        %v753 = vunpack.c.l.b16 %v625
        %v754 = vunpack.c.l.b16 %v626
        %v755 = vunpack.c.l.b16 %v627
        %v756 = vunpack.c.l.b16 %v628
        %v757 = vunpack.c.l.b16 %v629
        %v758 = vunpack.c.l.b16 %v630
        %v759 = vunpack.c.l.b16 %v631
        %v760 = vunpack.c.l.b16 %v632
        %v761 = vunpack.c.l.b16 %v633
        %v762 = vunpack.c.l.b16 %v634
        %v763 = vunpack.c.l.b16 %v635
        %v764 = vunpack.c.l.b16 %v636
        %v765 = vunpack.c.l.b16 %v637
        %v766 = vunpack.c.l.b16 %v638
        %v767 = vunpack.c.l.b16 %v639
        %v768 = vunpack.c.l.b16 %v640
        %v769 = vunpack.c.l.b16 %v641
        %v770 = vunpack.c.l.b16 %v642
        %v771 = vunpack.c.l.b16 %v643
        %v772 = vunpack.c.l.b16 %v644
        %v773 = vunpack.c.l.b16 %v645
        %v774 = vunpack.c.l.b16 %v646
        %v775 = vunpack.c.l.b16 %v647
        %v776 = vunpack.c.l.b16 %v648
        %v777 = vunpack.c.l.b16 %v649
        %v778 = vunpack.c.l.b16 %v650
        %v779 = vunpack.c.l.b16 %v651
        %v780 = vunpack.c.l.b16 %v652
        %v781 = vunpack.c.l.b16 %v653
        %v782 = vunpack.c.l.b16 %v654
        %v783 = vunpack.c.l.b16 %v655
        %v784 = vunpack.c.l.b16 %v656
        %v785 = vunpack.c.l.b16 %v657
        %v786 = vunpack.c.l.b16 %v658
        %v787 = vunpack.c.l.b16 %v659
        %v788 = vunpack.c.l.b16 %v660
        %v789 = vunpack.c.l.b16 %v661
        %v790 = vunpack.c.l.b16 %v662
        %v791 = vunpack.c.l.b16 %v663
        %v792 = vunpack.c.l.b16 %v664
        %v793 = vunpack.c.l.b16 %v665
        %v794 = vunpack.c.l.b16 %v666
        %v795 = vunpack.c.l.b16 %v667
        %v796 = vunpack.c.l.b16 %v668
        %v797 = vpack.c.b16 %v734, %v733
        %v798 = vpack.c.b16 %v736, %v735
        %v799 = vpack.c.b16 %v738, %v737
        %v800 = vpack.c.b16 %v740, %v739
        %v801 = vpack.c.b16 %v742, %v741
        %v802 = vpack.c.b16 %v744, %v743
        %v803 = vpack.c.b16 %v746, %v745
        %v804 = vpack.c.b16 %v748, %v747
        %v805 = vpack.c.b16 %v750, %v749
        %v806 = vpack.c.b16 %v752, %v751
        %v807 = vpack.c.b16 %v754, %v753
        %v808 = vpack.c.b16 %v756, %v755
        %v809 = vpack.c.b16 %v758, %v757
        %v810 = vpack.c.b16 %v760, %v759
        %v811 = vpack.c.b16 %v762, %v761
        %v812 = vpack.c.b16 %v764, %v763
        %v813 = vpack.c.b16 %v766, %v765
        %v814 = vpack.c.b16 %v768, %v767
        %v815 = vpack.c.b16 %v770, %v769
        %v816 = vpack.c.b16 %v772, %v771
        %v817 = vpack.c.b16 %v774, %v773
        %v818 = vpack.c.b16 %v776, %v775
        %v819 = vpack.c.b16 %v778, %v777
        %v820 = vpack.c.b16 %v780, %v779
        %v821 = vpack.c.b16 %v782, %v781
        %v822 = vpack.c.b16 %v784, %v783
        %v823 = vpack.c.b16 %v786, %v785
        %v824 = vpack.c.b16 %v788, %v787
        %v825 = vpack.c.b16 %v790, %v789
        %v826 = vpack.c.b16 %v792, %v791
        %v827 = vpack.c.b16 %v794, %v793
        %v828 = vpack.c.b16 %v796, %v795
        %861 = vmatprep.subr.bf16.mxu0 0
        %862 = vmatpush1.bf16.msra.mxu0 %v797
        %863 = vmatprep.subr.bf16.mxu0 0
        %864 = vmatpush1.bf16.msra.mxu0 %v798
        %865 = vmatprep.subr.bf16.mxu0 0
        %866 = vmatpush1.bf16.msra.mxu0 %v799
        %867 = vmatprep.subr.bf16.mxu0 0
        %868 = vmatpush1.bf16.msra.mxu0 %v800
        %869 = vmatprep.subr.bf16.mxu0 0
        %870 = vmatpush1.bf16.msra.mxu0 %v801
        %871 = vmatprep.subr.bf16.mxu0 0
        %872 = vmatpush1.bf16.msra.mxu0 %v802
        %873 = vmatprep.subr.bf16.mxu0 0
        %874 = vmatpush1.bf16.msra.mxu0 %v803
        %875 = vmatprep.subr.bf16.mxu0 0
        %876 = vmatpush1.bf16.msra.mxu0 %v804
        %877 = vmatprep.subr.bf16.mxu0 0
        %878 = vmatpush1.bf16.msra.mxu0 %v805
        %879 = vmatprep.subr.bf16.mxu0 0
        %880 = vmatpush1.bf16.msra.mxu0 %v806
        %881 = vmatprep.subr.bf16.mxu0 0
        %882 = vmatpush1.bf16.msra.mxu0 %v807
        %883 = vmatprep.subr.bf16.mxu0 0
        %884 = vmatpush1.bf16.msra.mxu0 %v808
        %885 = vmatprep.subr.bf16.mxu0 0
        %886 = vmatpush1.bf16.msra.mxu0 %v809
        %887 = vmatprep.subr.bf16.mxu0 0
        %888 = vmatpush1.bf16.msra.mxu0 %v810
        %889 = vmatprep.subr.bf16.mxu0 0
        %890 = vmatpush1.bf16.msra.mxu0 %v811
        %891 = vmatprep.subr.bf16.mxu0 0
        %892 = vmatpush1.bf16.msra.mxu0 %v812
        %893 = vmatprep.mubr.bf16.mxu0 %v602
        %894 = vmatmul.mubr.bf16.gmra.mrb[0].mxu0 %v601
        %v895 = vpop.f32.mrb[0].mxu0
        %v896 = vadd.f32 0.0, %v895
        %v897 = vpop.f32.mrb[0].mxu0
        %v898 = vpop.f32.mrb[0].mxu0
        %v899 = vadd.f32 0.0, %v898
        %v900 = vpop.f32.mrb[0].mxu0
        %901 = vdwg.mxu0
        %902 = vmatprep.subr.bf16.mxu0 0
        %903 = vmatpush1.bf16.msra.mxu0 %v813
        %904 = vmatprep.subr.bf16.mxu0 0
        %905 = vmatpush1.bf16.msra.mxu0 %v814
        %906 = vmatprep.subr.bf16.mxu0 0
        %907 = vmatpush1.bf16.msra.mxu0 %v815
        %908 = vmatprep.subr.bf16.mxu0 0
        %909 = vmatpush1.bf16.msra.mxu0 %v816
        %910 = vmatprep.subr.bf16.mxu0 0
        %911 = vmatpush1.bf16.msra.mxu0 %v817
        %912 = vmatprep.subr.bf16.mxu0 0
        %913 = vmatpush1.bf16.msra.mxu0 %v818
        %914 = vmatprep.subr.bf16.mxu0 0
        %915 = vmatpush1.bf16.msra.mxu0 %v819
        %916 = vmatprep.subr.bf16.mxu0 0
        %917 = vmatpush1.bf16.msra.mxu0 %v820
        %918 = vmatprep.subr.bf16.mxu0 0
        %919 = vmatpush1.bf16.msra.mxu0 %v821
        %920 = vmatprep.subr.bf16.mxu0 0
        %921 = vmatpush1.bf16.msra.mxu0 %v822
        %922 = vmatprep.subr.bf16.mxu0 0
        %923 = vmatpush1.bf16.msra.mxu0 %v823
        %924 = vmatprep.subr.bf16.mxu0 0
        %925 = vmatpush1.bf16.msra.mxu0 %v824
        %926 = vmatprep.subr.bf16.mxu0 0
        %927 = vmatpush1.bf16.msra.mxu0 %v825
        %928 = vmatprep.subr.bf16.mxu0 0
        %929 = vmatpush1.bf16.msra.mxu0 %v826
        %930 = vmatprep.subr.bf16.mxu0 0
        %931 = vmatpush1.bf16.msra.mxu0 %v827
        %932 = vmatprep.subr.bf16.mxu0 0
        %933 = vmatpush1.bf16.msra.mxu0 %v828
        %934 = vmatprep.mubr.bf16.mxu0 %v604
        %935 = vmatmul.mubr.bf16.gmra.mrb[0].mxu0 %v603
        %v936 = vpop.f32.mrb[0].mxu0
        %v937 = vadd.f32 %v896, %v936
        %v938 = vpop.f32.mrb[0].mxu0
        %v939 = vpop.f32.mrb[0].mxu0
        %v940 = vadd.f32 %v899, %v939
        %v941 = vpop.f32.mrb[0].mxu0
        %942 = vdwg.mxu0
        %v943 = vadd.f32 %v599, %v937
        %v944 = vadd.f32 %v600, %v940
        %945 = vst [vmem:[%s409] sm:$0xff] %v943
        %946 = vst [vmem:[%s409 + $0x8] sm:$0xff] %v944
        %s947 = sand.u32 %s209, 1
        %s948 = sand.u32 %s209, 1
        %s949 = smul.addr %s948, 16
        %s950 = scalar_lea.vmem [#allocation5], %s949
        // Predicated region
        $region76: #{fused_model.4} parent=62 // pred_check
          %p951 = pneg %p219
        $region77: #{fused_model.4} parent=62 // pred_check_branch
          %953 = sbr.rel (%p951) target = $region79
        $region78: #{fused_model.4} parent=62 // pred_region
          %s954 = smul.u32 2, %s25
          %s955 = smul.addr %s954, 2
          %s956 = sadd.s32 %s26, %s955
          %s957 = smul.addr %s956, 8
          %s958 = scalar_lea.vmem %s6, %s957
          // Predicated region
          $region80: #{fused_model.4} parent=78 // pred_check
            _
          $region81: #{fused_model.4} parent=78 // pred_check_branch
            %960 = sbr.rel (0) target = $region83
          $region82: #{fused_model.4} parent=78 // pred_region
            // Predicated region
            $region84: #{fused_model.4} parent=82 // pred_check
              _
            $region85: #{fused_model.4} parent=82 // pred_check_branch
              %962 = sbr.rel (0) target = $region87
            $region86: #{fused_model.4} parent=82 // pred_region
              // Predicated region
              $region99: #{fused_model.4} parent=86 // pred_check
                _
              $region100: #{fused_model.4} parent=86 // pred_check_branch
                %979 = sbr.rel (0) target = $region102
              $region101: #{fused_model.4} parent=86 // pred_region
                loop: start=0, step=1, limit=1
                $region103: #{fused_model.4} parent=101 // loop_pre_header
                  _
                $region104: #{fused_model.4} parent=101 // loop_header
                  %s981 = sphi 0, %s985
                  %p982 = scmp.ge.s32.totalorder %s981, 1
                  %s986 = sphi %s950, %s950
                  %s987 = sphi %s958, %s958
                $region105: #{fused_model.4} parent=101 // loop_header_branch
                  %984 = sbr.rel (%p982) target = $region109
                $region106: #{fused_model.4} parent=101 // loop_body
                  %v988 = vld [vmem:[%s986] sm:$0xff]
                  %989 = vst [vmem:[%s987] sm:$0xff] %v988
                  %v990 = vld [vmem:[%s986 + $0x8] sm:$0xff]
                  %991 = vst [vmem:[%s987 + $0x10] sm:$0xff] %v990
                $region107: #{fused_model.4} parent=101 // loop_footer
                  %s985 = sadd.s32 1, %s981
                $region108: #{fused_model.4} parent=101 // loop_footer_branch
                  %980 = sbr.rel target = $region104
                $region109: #{fused_model.4} parent=101 // loop_exit
                  _
              $region102: #{fused_model.4} parent=86 // pred_fallthru
                _
              // Predicated region
              $region110: #{fused_model.4} parent=86 // pred_check
                _
              $region111: #{fused_model.4} parent=86 // pred_check_branch
                %993 = sbr.rel target = $region113
              $region112: #{fused_model.4} parent=86 // pred_region
                _
              $region113: #{fused_model.4} parent=86 // pred_fallthru
                _
            $region87: #{fused_model.4} parent=82 // pred_fallthru
              _
            // Predicated region
            $region88: #{fused_model.4} parent=82 // pred_check
              _
            $region89: #{fused_model.4} parent=82 // pred_check_branch
              %964 = sbr.rel target = $region91
            $region90: #{fused_model.4} parent=82 // pred_region
              loop: start=0, step=1, limit=1
              $region92: #{fused_model.4} parent=90 // loop_pre_header
                _
              $region93: #{fused_model.4} parent=90 // loop_header
                %s967 = sphi 0, %s971
                %p968 = scmp.ge.s32.totalorder %s967, 1
                %s972 = sphi %s950, %s950
                %s973 = sphi %s958, %s958
              $region94: #{fused_model.4} parent=90 // loop_header_branch
                %970 = sbr.rel (%p968) target = $region98
              $region95: #{fused_model.4} parent=90 // loop_body
                %v974 = vld [vmem:[%s972] sm:$0xff]
                %975 = vst [vmem:[%s973] sm:$0xff] %v974
                %v976 = vld [vmem:[%s972 + $0x8] sm:$0xff]
                %977 = vst [vmem:[%s973 + $0x10] sm:$0xff] %v976
              $region96: #{fused_model.4} parent=90 // loop_footer
                %s971 = sadd.s32 1, %s967
              $region97: #{fused_model.4} parent=90 // loop_footer_branch
                %966 = sbr.rel target = $region93
              $region98: #{fused_model.4} parent=90 // loop_exit
                _
            $region91: #{fused_model.4} parent=82 // pred_fallthru
              _
          $region83: #{fused_model.4} parent=78 // pred_fallthru
            _
          %994 = vnop
        $region79: #{fused_model.4} parent=62 // pred_fallthru
          _
      $region63: #{fused_model.4} parent=5 // pred_fallthru
        _
      %p995 = scmp.le.s32.totalorder 2, %s15
      // Predicated region
      $region114: #{fused_model.4} parent=5 // pred_check
        %p996 = pneg %p995
      $region115: #{fused_model.4} parent=5 // pred_check_branch
        %998 = sbr.rel (%p996) target = $region117
      $region116: #{fused_model.4} parent=5 // pred_region
        %s999 = ssub.s32 %s15, 2
        // Predicated region
        $region118: #{fused_model.4} parent=116 // pred_check
          %p1000 = pneg %p225
        $region119: #{fused_model.4} parent=116 // pred_check_branch
          %1002 = sbr.rel (%p1000) target = $region121
        $region120: #{fused_model.4} parent=116 // pred_region
          %s1003 = sand.u32 %s210, 1
          %s1004 = sand.u32 %s210, 1
          %s1005 = smul.addr %s1004, 16
          %s1006 = scalar_lea.vmem [#allocation5], %s1005
        $region121: #{fused_model.4} parent=116 // pred_fallthru
          _
      $region117: #{fused_model.4} parent=5 // pred_fallthru
        _
    $region6: #{fused_model.4} parent=1 // loop_footer
      %s19 = sadd.s32 1, %s15
    $region7: #{fused_model.4} parent=1 // loop_footer_branch
      %14 = sbr.rel target = $region3
    $region8: #{fused_model.4} parent=1 // loop_exit
      _
    %1007 = vsyncpa [#allocation4], 1
    %s1008 = scalar_lea.sflag [#allocation4], 1
    %1009 = vsyncpa %s1008, 1

</llo_original>
